<compile_context>
chip_gen: v5e
topology: v5e:2x2
jax: 0.10.0
libtpu: 0.0.40
codegen_flags: <defaults>
</compile_context>

<pallas_src>
import jax
import jax.numpy as jnp
from jax import lax
from jax.experimental import pallas as pl
from jax.experimental.pallas import tpu as pltpu


# ----------------------------- kernel factory ------------------------------------

def _make_fused_kernel(N, H, W, Cin, Cout, stride, has_shortcut):
    Ho = (H - 1) // stride + 1
    Wo = (W - 1) // stride + 1
    M = N * Ho * Wo                       # batch folded into the matmul M dimension

    def _conv3x3(pad_ref, w_ref, C, s):
        """3x3 conv as 9 accumulated tap matmuls (no im2col matrix materialized).

        pad_ref: (N, Hp+2, Wp+2, C) zero-bordered VMEM scratch holding the input map.
        w_ref:   (9, C, Cout) bf16 weights, taps ordered (ky, kx).
        returns  (M, Cout) float32.
        """
        padded = pad_ref[...]                                 # single VMEM load
        acc = jnp.zeros((M, Cout), jnp.float32)
        for dy in range(3):
            for dx in range(3):
                if s == 1:
                    patch = padded[:, dy:dy + Ho, dx:dx + Wo, :]
                else:
                    # TODO(synk): stride>1 decimation would be cheaper at the
                    # DMA / index_map level than an in-VMEM strided slice.
                    patch = lax.slice(
                        padded, (0, dy, dx, 0),
                        (N, dy + (Ho - 1) * s + 1, dx + (Wo - 1) * s + 1, C),
                        (1, s, s, 1))
                p2d = patch.reshape(M, C).astype(jnp.bfloat16)   # bf16 into the MXU
                acc = acc + jnp.dot(p2d, w_ref[3 * dy + dx],
                                    preferred_element_type=jnp.float32)
        return acc

    def kernel(x_ref, s1_ref, b1_ref, s2_ref, b2_ref,
               w1_ref, w2_ref, wsc_ref, wfc1_ref, wfc2_ref,
               o_ref, pad1_ref, pad2_ref):
        # ---- BN1 (folded affine) + ReLU, f32, VMEM-resident ---------------------
        x2d = x_ref[...].reshape(N * H * W, Cin)                       # (N*H*W, Cin)
        pre1 = jnp.maximum(x2d * s1_ref[...] + b1_ref[...], 0.0)

        # ---- halo for conv1: zero-init VMEM scratch + interior store ------------
        pad1_ref[...] = jnp.zeros(pad1_ref.shape, jnp.float32)
        pad1_ref[:, 1:H + 1, 1:W + 1, :] = pre1.reshape(N, H, W, Cin)

        # ---- shortcut ------------------------------------------------------------
        if has_shortcut:                          # 1x1 conv on the pre-activation
            if stride == 1:
                sc_in = pre1
            else:
                sc_in = lax.slice(
                    pre1.reshape(N, H, W, Cin), (0, 0, 0, 0),
                    (N, (Ho - 1) * stride + 1, (Wo - 1) * stride + 1, Cin),
                    (1, stride, stride, 1)).reshape(M, Cin)
            shortcut = jnp.dot(sc_in.astype(jnp.bfloat16), wsc_ref[...],
                               preferred_element_type=jnp.float32)     # (M, Cout)
        else:                                     # identity (Cin == Cout, stride 1)
            shortcut = x2d

        # ---- conv1: 9 tap matmuls, bf16 operands, f32 accumulation ---------------
        c1 = _conv3x3(pad1_ref, w1_ref, Cin, stride)                   # (M, Cout)

        # ---- BN2 (folded affine) + ReLU ------------------------------------------
        pre2 = jnp.maximum(c1 * s2_ref[...] + b2_ref[...], 0.0)

        # ---- halo for conv2 -------------------------------------------------------
        pad2_ref[...] = jnp.zeros(pad2_ref.shape, jnp.float32)
        pad2_ref[:, 1:Ho + 1, 1:Wo + 1, :] = pre2.reshape(N, Ho, Wo, Cout)

        # ---- conv2: 3x3 stride 1 --------------------------------------------------
        c2 = _conv3x3(pad2_ref, w2_ref, Cout, 1)                       # (M, Cout)

        # ---- squeeze-and-excite gate (per image, f32 on VPU/EUP) ------------------
        c2_3d = c2.reshape(N, Ho * Wo, Cout)
        y = jnp.mean(c2_3d, axis=1)                                    # (N, Cout)
        h = jnp.maximum(jnp.dot(y, wfc1_ref[...],
                                preferred_element_type=jnp.float32), 0.0)
        g = jax.nn.sigmoid(jnp.dot(h, wfc2_ref[...],
                                   preferred_element_type=jnp.float32))  # (N, Cout)

        # ---- gate * conv2 + residual ----------------------------------------------
        out = c2_3d * g[:, None, :] + shortcut.reshape(N, Ho * Wo, Cout)
        o_ref[...] = out.astype(o_ref.dtype)

    return kernel, Ho, Wo


# ----------------------------- block wrapper --------------------------------------

def se_preact_block(x_nchw, p, in_planes, planes, stride):
    """Forward pass of SEPreActBlock.  Input/output are NCHW (PyTorch convention)."""
    N, Cin, H, W = x_nchw.shape
    Cout = planes
    has_shortcut = (stride != 1) or (in_planes != planes)

    # layout glue: NCHW -> NHWC (channels on the TPU lane dimension)
    x = jnp.transpose(x_nchw, (0, 2, 3, 1))

    kernel, Ho, Wo = _make_fused_kernel(N, H, W, Cin, Cout, stride, has_shortcut)
    M = N * Ho * Wo
    Cr = p["w_fc1"].shape[-1]

    # conv weights pre-split per tap (HWIO -> (9, Cin, Cout)) and cast to bf16
    w1 = p["w_conv1"].reshape(9, Cin, Cout).astype(jnp.bfloat16)
    w2 = p["w_conv2"].reshape(9, Cout, Cout).astype(jnp.bfloat16)
    w_sc = (p["w_sc"] if has_shortcut
            else jnp.zeros((Cin, Cout), jnp.float32)).astype(jnp.bfloat16)

    flops = (2 * M * Cout * (9 * Cin + 9 * Cout)
             + (2 * M * Cout * Cin if has_shortcut else 0)
             + 4 * N * Cr * Cout)
    bytes_accessed = (N * H * W * Cin * 4 + M * Cout * 4
                      + (9 * Cin * Cout + 9 * Cout * Cout + Cin * Cout) * 2
                      + 2 * Cr * Cout * 4 + 2 * (Cin + Cout) * 4)

    # No grid: all operands / outputs are whole-array VMEM blocks, intermediates
    # never touch HBM, and the batch is already folded into the matmul rows.
    out_flat = pl.pallas_call(
        kernel,
        out_shape=jax.ShapeDtypeStruct((N, Ho * Wo, Cout), x.dtype),
        scratch_shapes=[
            pltpu.VMEM((N, H + 2, W + 2, Cin), jnp.float32),     # conv1 halo buffer
            pltpu.VMEM((N, Ho + 2, Wo + 2, Cout), jnp.float32),  # conv2 halo buffer
        ],
        cost_estimate=pl.CostEstimate(flops=flops,
                                      transcendentals=N * Cout,
                                      bytes_accessed=bytes_accessed),
    )(x,
      p["scale1"].reshape(1, Cin), p["bias1"].reshape(1, Cin),
      p["scale2"].reshape(1, Cout), p["bias2"].reshape(1, Cout),
      w1, w2, w_sc, p["w_fc1"], p["w_fc2"])

    out = out_flat.reshape(N, Ho, Wo, Cout)          # free metadata reshape at JAX level
    return jnp.transpose(out, (0, 3, 1, 2))          # NHWC -> NCHW


# ----------------------------- pure-JAX reference ----------------------------------

def reference(x_nchw, p, in_planes, planes, stride):
    x = jnp.transpose(x_nchw, (0, 2, 3, 1))
    dn = ("NHWC", "HWIO", "NHWC")

    def bnr(a, s, b):
        return jnp.maximum(a * s[None, None, None, :] + b[None, None, None, :], 0.0)

    pre1 = bnr(x, p["scale1"], p["bias1"])
    if stride != 1 or in_planes != planes:
        sc = lax.conv_general_dilated(pre1, p["w_sc"].reshape(1, 1, in_planes, planes),
                                      (stride, stride), "VALID", dimension_numbers=dn)
    else:
        sc = x
    c1 = lax.conv_general_dilated(pre1, p["w_conv1"], (stride, stride),
                                  [(1, 1), (1, 1)], dimension_numbers=dn)
    pre2 = bnr(c1, p["scale2"], p["bias2"])
    c2 = lax.conv_general_dilated(pre2, p["w_conv2"], (1, 1),
                                  [(1, 1), (1, 1)], dimension_numbers=dn)
    y = jnp.mean(c2, axis=(1, 2))                            # (N, C)
    h = jnp.maximum(y @ p["w_fc1"], 0.0)
    g = jax.nn.sigmoid(h @ p["w_fc2"])
    out = c2 * g[:, None, None, :] + sc
    return jnp.transpose(out, (0, 3, 1, 2))


# ----------------------------- main -------------------------------------------------

if __name__ == "__main__":
    N, H, W = 2, 8, 8
    in_planes, planes, stride, reduction = 16, 32, 1, 16
    eps = 1e-5

    key = jax.random.PRNGKey(0)
    ks = jax.random.split(key, 10)

    def conv_w(k, kh, kw, cin, cout):
        fan_in = kh * kw * cin
        return (jax.random.normal(k, (kh, kw, cin, cout), jnp.float32)
                / jnp.sqrt(float(fan_in)))

    gamma1 = 1.0 + 0.1 * jax.random.normal(ks[0], (in_planes,), jnp.float32)
    beta1 = 0.1 * jax.random.normal(ks[1], (in_planes,), jnp.float32)
    gamma2 = 1.0 + 0.1 * jax.random.normal(ks[2], (planes,), jnp.float32)
    beta2 = 0.1 * jax.random.normal(ks[3], (planes,), jnp.float32)

    # Inference-mode BatchNorm fold (PyTorch-init running stats: mean=0, var=1).
    rm1 = jnp.zeros((in_planes,), jnp.float32); rv1 = jnp.ones((in_planes,), jnp.float32)
    rm2 = jnp.zeros((planes,), jnp.float32);    rv2 = jnp.ones((planes,), jnp.float32)
    s1 = gamma1 * lax.rsqrt(rv1 + eps); b1 = beta1 - rm1 * s1
    s2 = gamma2 * lax.rsqrt(rv2 + eps); b2 = beta2 - rm2 * s2

    params = {
        "scale1": s1, "bias1": b1, "scale2": s2, "bias2": b2,
        "w_conv1": conv_w(ks[4], 3, 3, in_planes, planes),      # HWIO
        "w_conv2": conv_w(ks[5], 3, 3, planes, planes),
        "w_sc": conv_w(ks[6], 1, 1, in_planes, planes)[0, 0],   # (Cin, Cout)
        # SE fc weights (bias=False in the PyTorch module), stored transposed for y @ W:
        "w_fc1": (jax.random.normal(ks[7], (planes, planes // reduction), jnp.float32)
                  / jnp.sqrt(float(planes))),
        "w_fc2": (jax.random.normal(ks[8], (planes // reduction, planes), jnp.float32)
                  / jnp.sqrt(float(planes // reduction))),
    }

    x = jax.random.normal(ks[9], (N, in_planes, H, W), jnp.float32)

    out = jax.block_until_ready(se_preact_block(x, params, in_planes, planes, stride))
    ref = reference(x, params, in_planes, planes, stride)

    assert out.shape == (N, planes, H, W), out.shape
    assert jnp.all(jnp.isfinite(out)), "non-finite output"
    max_err = float(jnp.max(jnp.abs(out - ref)))
    # bf16 MXU operands with f32 accumulation vs. the all-f32 reference.
    assert max_err < 3e-2, f"mismatch vs reference: {max_err}"

    print("KERNEL_OK")
</pallas_src>

<mosaic_0001>
module attributes {stable_mosaic.version = 11 : i64} {
  func.func @kernel(%arg0: memref<2x8x8x16xf32, #tpu.memory_space<vmem>>, %arg1: memref<1x16xf32, #tpu.memory_space<vmem>>, %arg2: memref<1x16xf32, #tpu.memory_space<vmem>>, %arg3: memref<1x32xf32, #tpu.memory_space<vmem>>, %arg4: memref<1x32xf32, #tpu.memory_space<vmem>>, %arg5: memref<9x16x32xbf16, #tpu.memory_space<vmem>>, %arg6: memref<9x32x32xbf16, #tpu.memory_space<vmem>>, %arg7: memref<16x32xbf16, #tpu.memory_space<vmem>>, %arg8: memref<32x2xf32, #tpu.memory_space<vmem>>, %arg9: memref<2x32xf32, #tpu.memory_space<vmem>>, %arg10: memref<2x64x32xf32, #tpu.memory_space<vmem>>, %arg11: memref<2x10x10x16xf32, #tpu.memory_space<vmem>>, %arg12: memref<2x10x10x32xf32, #tpu.memory_space<vmem>>) attributes {dimension_semantics = [], scalar_prefetch = 0 : i64, scratch_operands = 2 : i64, tpu.core_type = #tpu.core_type<tc>} {
    %c0 = arith.constant 0 : index
    %c0_0 = arith.constant 0 : index
    %c0_1 = arith.constant 0 : index
    %c0_2 = arith.constant 0 : index
    %0 = vector.load %arg0[%c0, %c0_0, %c0_1, %c0_2] : memref<2x8x8x16xf32, #tpu.memory_space<vmem>>, vector<2x8x8x16xf32>
    %1 = vector.shape_cast %0 : vector<2x8x8x16xf32> to vector<128x16xf32>
    %c0_3 = arith.constant 0 : index
    %c0_4 = arith.constant 0 : index
    %2 = vector.load %arg1[%c0_3, %c0_4] : memref<1x16xf32, #tpu.memory_space<vmem>>, vector<1x16xf32>
    %3 = vector.broadcast %2 : vector<1x16xf32> to vector<128x16xf32>
    %4 = arith.mulf %1, %3 : vector<128x16xf32>
    %c0_5 = arith.constant 0 : index
    %c0_6 = arith.constant 0 : index
    %5 = vector.load %arg2[%c0_5, %c0_6] : memref<1x16xf32, #tpu.memory_space<vmem>>, vector<1x16xf32>
    %6 = vector.broadcast %5 : vector<1x16xf32> to vector<128x16xf32>
    %7 = arith.addf %4, %6 : vector<128x16xf32>
    %cst = arith.constant 0.000000e+00 : f32
    %8 = vector.broadcast %cst : f32 to vector<128x16xf32>
    %9 = arith.maximumf %7, %8 : vector<128x16xf32>
    %cst_7 = arith.constant 0.000000e+00 : f32
    %10 = vector.broadcast %cst_7 : f32 to vector<2x10x10x16xf32>
    %c0_8 = arith.constant 0 : index
    %c0_9 = arith.constant 0 : index
    %c0_10 = arith.constant 0 : index
    %c0_11 = arith.constant 0 : index
    %11 = vector.load %arg11[%c0_8, %c0_9, %c0_10, %c0_11] : memref<2x10x10x16xf32, #tpu.memory_space<vmem>>, vector<2x10x10x16xf32>
    tpu.vector_store %arg11[%c0_8, %c0_9, %c0_10, %c0_11], %10 {strides = array<i32>} : memref<2x10x10x16xf32, #tpu.memory_space<vmem>>, vector<2x10x10x16xf32>,
    %12 = vector.shape_cast %9 : vector<128x16xf32> to vector<2x8x8x16xf32>
    %c0_12 = arith.constant 0 : index
    %c1 = arith.constant 1 : index
    %c1_13 = arith.constant 1 : index
    %c0_14 = arith.constant 0 : index
    %13 = vector.load %arg11[%c0_12, %c1, %c1_13, %c0_14] : memref<2x10x10x16xf32, #tpu.memory_space<vmem>>, vector<2x8x8x16xf32>
    tpu.vector_store %arg11[%c0_12, %c1, %c1_13, %c0_14], %12 {strides = array<i32>} : memref<2x10x10x16xf32, #tpu.memory_space<vmem>>, vector<2x8x8x16xf32>,
    %14 = arith.truncf %9 : vector<128x16xf32> to vector<128x16xbf16>
    %c0_15 = arith.constant 0 : index
    %c0_16 = arith.constant 0 : index
    %15 = vector.load %arg7[%c0_15, %c0_16] : memref<16x32xbf16, #tpu.memory_space<vmem>>, vector<16x32xbf16>
    %cst_17 = arith.constant dense<0.000000e+00> : vector<128x32xf32>
    %16 = tpu.matmul %14, %15, %cst_17 {dimension_numbers = #tpu.dot_dimension_numbers<[1], [0], [0], [1], [0, 0, 1, 1], [], []>} : vector<128x16xbf16>, vector<16x32xbf16>, vector<128x32xf32> -> vector<128x32xf32>
    %c0_18 = arith.constant 0 : index
    %c0_19 = arith.constant 0 : index
    %c0_20 = arith.constant 0 : index
    %c0_21 = arith.constant 0 : index
    %17 = vector.load %arg11[%c0_18, %c0_19, %c0_20, %c0_21] : memref<2x10x10x16xf32, #tpu.memory_space<vmem>>, vector<2x10x10x16xf32>
    %cst_22 = arith.constant 0.000000e+00 : f32
    %18 = vector.broadcast %cst_22 : f32 to vector<128x32xf32>
    %19 = vector.extract_strided_slice %17 {offsets = [0, 0, 0, 0], sizes = [2, 8, 8, 16], strides = [1, 1, 1, 1]} : vector<2x10x10x16xf32> to vector<2x8x8x16xf32>
    %20 = vector.shape_cast %19 : vector<2x8x8x16xf32> to vector<128x16xf32>
    %21 = arith.truncf %20 : vector<128x16xf32> to vector<128x16xbf16>
    %c0_23 = arith.constant 0 : index
    %c0_24 = arith.constant 0 : index
    %c0_25 = arith.constant 0 : index
    %22 = vector.load %arg5[%c0_23, %c0_24, %c0_25] : memref<9x16x32xbf16, #tpu.memory_space<vmem>>, vector<1x16x32xbf16>
    %23 = vector.shape_cast %22 : vector<1x16x32xbf16> to vector<16x32xbf16>
    %cst_26 = arith.constant dense<0.000000e+00> : vector<128x32xf32>
    %24 = tpu.matmul %21, %23, %cst_26 {dimension_numbers = #tpu.dot_dimension_numbers<[1], [0], [0], [1], [0, 0, 1, 1], [], []>} : vector<128x16xbf16>, vector<16x32xbf16>, vector<128x32xf32> -> vector<128x32xf32>
    %25 = arith.addf %18, %24 : vector<128x32xf32>
    %26 = vector.extract_strided_slice %17 {offsets = [0, 0, 1, 0], sizes = [2, 8, 8, 16], strides = [1, 1, 1, 1]} : vector<2x10x10x16xf32> to vector<2x8x8x16xf32>
    %27 = vector.shape_cast %26 : vector<2x8x8x16xf32> to vector<128x16xf32>
    %28 = arith.truncf %27 : vector<128x16xf32> to vector<128x16xbf16>
    %c1_27 = arith.constant 1 : index
    %c0_28 = arith.constant 0 : index
    %c0_29 = arith.constant 0 : index
    %29 = vector.load %arg5[%c1_27, %c0_28, %c0_29] : memref<9x16x32xbf16, #tpu.memory_space<vmem>>, vector<1x16x32xbf16>
    %30 = vector.shape_cast %29 : vector<1x16x32xbf16> to vector<16x32xbf16>
    %cst_30 = arith.constant dense<0.000000e+00> : vector<128x32xf32>
    %31 = tpu.matmul %28, %30, %cst_30 {dimension_numbers = #tpu.dot_dimension_numbers<[1], [0], [0], [1], [0, 0, 1, 1], [], []>} : vector<128x16xbf16>, vector<16x32xbf16>, vector<128x32xf32> -> vector<128x32xf32>
    %32 = arith.addf %25, %31 : vector<128x32xf32>
    %33 = vector.extract_strided_slice %17 {offsets = [0, 0, 2, 0], sizes = [2, 8, 8, 16], strides = [1, 1, 1, 1]} : vector<2x10x10x16xf32> to vector<2x8x8x16xf32>
    %34 = vector.shape_cast %33 : vector<2x8x8x16xf32> to vector<128x16xf32>
    %35 = arith.truncf %34 : vector<128x16xf32> to vector<128x16xbf16>
    %c2 = arith.constant 2 : index
    %c0_31 = arith.constant 0 : index
    %c0_32 = arith.constant 0 : index
    %36 = vector.load %arg5[%c2, %c0_31, %c0_32] : memref<9x16x32xbf16, #tpu.memory_space<vmem>>, vector<1x16x32xbf16>
    %37 = vector.shape_cast %36 : vector<1x16x32xbf16> to vector<16x32xbf16>
    %cst_33 = arith.constant dense<0.000000e+00> : vector<128x32xf32>
    %38 = tpu.matmul %35, %37, %cst_33 {dimension_numbers = #tpu.dot_dimension_numbers<[1], [0], [0], [1], [0, 0, 1, 1], [], []>} : vector<128x16xbf16>, vector<16x32xbf16>, vector<128x32xf32> -> vector<128x32xf32>
    %39 = arith.addf %32, %38 : vector<128x32xf32>
    %40 = vector.extract_strided_slice %17 {offsets = [0, 1, 0, 0], sizes = [2, 8, 8, 16], strides = [1, 1, 1, 1]} : vector<2x10x10x16xf32> to vector<2x8x8x16xf32>
    %41 = vector.shape_cast %40 : vector<2x8x8x16xf32> to vector<128x16xf32>
    %42 = arith.truncf %41 : vector<128x16xf32> to vector<128x16xbf16>
    %c3 = arith.constant 3 : index
    %c0_34 = arith.constant 0 : index
    %c0_35 = arith.constant 0 : index
    %43 = vector.load %arg5[%c3, %c0_34, %c0_35] : memref<9x16x32xbf16, #tpu.memory_space<vmem>>, vector<1x16x32xbf16>
    %44 = vector.shape_cast %43 : vector<1x16x32xbf16> to vector<16x32xbf16>
    %cst_36 = arith.constant dense<0.000000e+00> : vector<128x32xf32>
    %45 = tpu.matmul %42, %44, %cst_36 {dimension_numbers = #tpu.dot_dimension_numbers<[1], [0], [0], [1], [0, 0, 1, 1], [], []>} : vector<128x16xbf16>, vector<16x32xbf16>, vector<128x32xf32> -> vector<128x32xf32>
    %46 = arith.addf %39, %45 : vector<128x32xf32>
    %47 = vector.extract_strided_slice %17 {offsets = [0, 1, 1, 0], sizes = [2, 8, 8, 16], strides = [1, 1, 1, 1]} : vector<2x10x10x16xf32> to vector<2x8x8x16xf32>
    %48 = vector.shape_cast %47 : vector<2x8x8x16xf32> to vector<128x16xf32>
    %49 = arith.truncf %48 : vector<128x16xf32> to vector<128x16xbf16>
    %c4 = arith.constant 4 : index
    %c0_37 = arith.constant 0 : index
    %c0_38 = arith.constant 0 : index
    %50 = vector.load %arg5[%c4, %c0_37, %c0_38] : memref<9x16x32xbf16, #tpu.memory_space<vmem>>, vector<1x16x32xbf16>
    %51 = vector.shape_cast %50 : vector<1x16x32xbf16> to vector<16x32xbf16>
    %cst_39 = arith.constant dense<0.000000e+00> : vector<128x32xf32>
    %52 = tpu.matmul %49, %51, %cst_39 {dimension_numbers = #tpu.dot_dimension_numbers<[1], [0], [0], [1], [0, 0, 1, 1], [], []>} : vector<128x16xbf16>, vector<16x32xbf16>, vector<128x32xf32> -> vector<128x32xf32>
    %53 = arith.addf %46, %52 : vector<128x32xf32>
    %54 = vector.extract_strided_slice %17 {offsets = [0, 1, 2, 0], sizes = [2, 8, 8, 16], strides = [1, 1, 1, 1]} : vector<2x10x10x16xf32> to vector<2x8x8x16xf32>
    %55 = vector.shape_cast %54 : vector<2x8x8x16xf32> to vector<128x16xf32>
    %56 = arith.truncf %55 : vector<128x16xf32> to vector<128x16xbf16>
    %c5 = arith.constant 5 : index
    %c0_40 = arith.constant 0 : index
    %c0_41 = arith.constant 0 : index
    %57 = vector.load %arg5[%c5, %c0_40, %c0_41] : memref<9x16x32xbf16, #tpu.memory_space<vmem>>, vector<1x16x32xbf16>
    %58 = vector.shape_cast %57 : vector<1x16x32xbf16> to vector<16x32xbf16>
    %cst_42 = arith.constant dense<0.000000e+00> : vector<128x32xf32>
    %59 = tpu.matmul %56, %58, %cst_42 {dimension_numbers = #tpu.dot_dimension_numbers<[1], [0], [0], [1], [0, 0, 1, 1], [], []>} : vector<128x16xbf16>, vector<16x32xbf16>, vector<128x32xf32> -> vector<128x32xf32>
    %60 = arith.addf %53, %59 : vector<128x32xf32>
    %61 = vector.extract_strided_slice %17 {offsets = [0, 2, 0, 0], sizes = [2, 8, 8, 16], strides = [1, 1, 1, 1]} : vector<2x10x10x16xf32> to vector<2x8x8x16xf32>
    %62 = vector.shape_cast %61 : vector<2x8x8x16xf32> to vector<128x16xf32>
    %63 = arith.truncf %62 : vector<128x16xf32> to vector<128x16xbf16>
    %c6 = arith.constant 6 : index
    %c0_43 = arith.constant 0 : index
    %c0_44 = arith.constant 0 : index
    %64 = vector.load %arg5[%c6, %c0_43, %c0_44] : memref<9x16x32xbf16, #tpu.memory_space<vmem>>, vector<1x16x32xbf16>
    %65 = vector.shape_cast %64 : vector<1x16x32xbf16> to vector<16x32xbf16>
    %cst_45 = arith.constant dense<0.000000e+00> : vector<128x32xf32>
    %66 = tpu.matmul %63, %65, %cst_45 {dimension_numbers = #tpu.dot_dimension_numbers<[1], [0], [0], [1], [0, 0, 1, 1], [], []>} : vector<128x16xbf16>, vector<16x32xbf16>, vector<128x32xf32> -> vector<128x32xf32>
    %67 = arith.addf %60, %66 : vector<128x32xf32>
    %68 = vector.extract_strided_slice %17 {offsets = [0, 2, 1, 0], sizes = [2, 8, 8, 16], strides = [1, 1, 1, 1]} : vector<2x10x10x16xf32> to vector<2x8x8x16xf32>
    %69 = vector.shape_cast %68 : vector<2x8x8x16xf32> to vector<128x16xf32>
    %70 = arith.truncf %69 : vector<128x16xf32> to vector<128x16xbf16>
    %c7 = arith.constant 7 : index
    %c0_46 = arith.constant 0 : index
    %c0_47 = arith.constant 0 : index
    %71 = vector.load %arg5[%c7, %c0_46, %c0_47] : memref<9x16x32xbf16, #tpu.memory_space<vmem>>, vector<1x16x32xbf16>
    %72 = vector.shape_cast %71 : vector<1x16x32xbf16> to vector<16x32xbf16>
    %cst_48 = arith.constant dense<0.000000e+00> : vector<128x32xf32>
    %73 = tpu.matmul %70, %72, %cst_48 {dimension_numbers = #tpu.dot_dimension_numbers<[1], [0], [0], [1], [0, 0, 1, 1], [], []>} : vector<128x16xbf16>, vector<16x32xbf16>, vector<128x32xf32> -> vector<128x32xf32>
    %74 = arith.addf %67, %73 : vector<128x32xf32>
    %75 = vector.extract_strided_slice %17 {offsets = [0, 2, 2, 0], sizes = [2, 8, 8, 16], strides = [1, 1, 1, 1]} : vector<2x10x10x16xf32> to vector<2x8x8x16xf32>
    %76 = vector.shape_cast %75 : vector<2x8x8x16xf32> to vector<128x16xf32>
    %77 = arith.truncf %76 : vector<128x16xf32> to vector<128x16xbf16>
    %c8 = arith.constant 8 : index
    %c0_49 = arith.constant 0 : index
    %c0_50 = arith.constant 0 : index
    %78 = vector.load %arg5[%c8, %c0_49, %c0_50] : memref<9x16x32xbf16, #tpu.memory_space<vmem>>, vector<1x16x32xbf16>
    %79 = vector.shape_cast %78 : vector<1x16x32xbf16> to vector<16x32xbf16>
    %cst_51 = arith.constant dense<0.000000e+00> : vector<128x32xf32>
    %80 = tpu.matmul %77, %79, %cst_51 {dimension_numbers = #tpu.dot_dimension_numbers<[1], [0], [0], [1], [0, 0, 1, 1], [], []>} : vector<128x16xbf16>, vector<16x32xbf16>, vector<128x32xf32> -> vector<128x32xf32>
    %81 = arith.addf %74, %80 : vector<128x32xf32>
    %c0_52 = arith.constant 0 : index
    %c0_53 = arith.constant 0 : index
    %82 = vector.load %arg3[%c0_52, %c0_53] : memref<1x32xf32, #tpu.memory_space<vmem>>, vector<1x32xf32>
    %83 = vector.broadcast %82 : vector<1x32xf32> to vector<128x32xf32>
    %84 = arith.mulf %81, %83 : vector<128x32xf32>
    %c0_54 = arith.constant 0 : index
    %c0_55 = arith.constant 0 : index
    %85 = vector.load %arg4[%c0_54, %c0_55] : memref<1x32xf32, #tpu.memory_space<vmem>>, vector<1x32xf32>
    %86 = vector.broadcast %85 : vector<1x32xf32> to vector<128x32xf32>
    %87 = arith.addf %84, %86 : vector<128x32xf32>
    %cst_56 = arith.constant 0.000000e+00 : f32
    %88 = vector.broadcast %cst_56 : f32 to vector<128x32xf32>
    %89 = arith.maximumf %87, %88 : vector<128x32xf32>
    %cst_57 = arith.constant 0.000000e+00 : f32
    %90 = vector.broadcast %cst_57 : f32 to vector<2x10x10x32xf32>
    %c0_58 = arith.constant 0 : index
    %c0_59 = arith.constant 0 : index
    %c0_60 = arith.constant 0 : index
    %c0_61 = arith.constant 0 : index
    %91 = vector.load %arg12[%c0_58, %c0_59, %c0_60, %c0_61] : memref<2x10x10x32xf32, #tpu.memory_space<vmem>>, vector<2x10x10x32xf32>
    tpu.vector_store %arg12[%c0_58, %c0_59, %c0_60, %c0_61], %90 {strides = array<i32>} : memref<2x10x10x32xf32, #tpu.memory_space<vmem>>, vector<2x10x10x32xf32>,
    %92 = vector.shape_cast %89 : vector<128x32xf32> to vector<2x8x8x32xf32>
    %c0_62 = arith.constant 0 : index
    %c1_63 = arith.constant 1 : index
    %c1_64 = arith.constant 1 : index
    %c0_65 = arith.constant 0 : index
    %93 = vector.load %arg12[%c0_62, %c1_63, %c1_64, %c0_65] : memref<2x10x10x32xf32, #tpu.memory_space<vmem>>, vector<2x8x8x32xf32>
    tpu.vector_store %arg12[%c0_62, %c1_63, %c1_64, %c0_65], %92 {strides = array<i32>} : memref<2x10x10x32xf32, #tpu.memory_space<vmem>>, vector<2x8x8x32xf32>,
    %c0_66 = arith.constant 0 : index
    %c0_67 = arith.constant 0 : index
    %c0_68 = arith.constant 0 : index
    %c0_69 = arith.constant 0 : index
    %94 = vector.load %arg12[%c0_66, %c0_67, %c0_68, %c0_69] : memref<2x10x10x32xf32, #tpu.memory_space<vmem>>, vector<2x10x10x32xf32>
    %cst_70 = arith.constant 0.000000e+00 : f32
    %95 = vector.broadcast %cst_70 : f32 to vector<128x32xf32>
    %96 = vector.extract_strided_slice %94 {offsets = [0, 0, 0, 0], sizes = [2, 8, 8, 32], strides = [1, 1, 1, 1]} : vector<2x10x10x32xf32> to vector<2x8x8x32xf32>
    %97 = vector.shape_cast %96 : vector<2x8x8x32xf32> to vector<128x32xf32>
    %98 = arith.truncf %97 : vector<128x32xf32> to vector<128x32xbf16>
    %c0_71 = arith.constant 0 : index
    %c0_72 = arith.constant 0 : index
    %c0_73 = arith.constant 0 : index
    %99 = vector.load %arg6[%c0_71, %c0_72, %c0_73] : memref<9x32x32xbf16, #tpu.memory_space<vmem>>, vector<1x32x32xbf16>
    %100 = vector.shape_cast %99 : vector<1x32x32xbf16> to vector<32x32xbf16>
    %cst_74 = arith.constant dense<0.000000e+00> : vector<128x32xf32>
    %101 = tpu.matmul %98, %100, %cst_74 {dimension_numbers = #tpu.dot_dimension_numbers<[1], [0], [0], [1], [0, 0, 1, 1], [], []>} : vector<128x32xbf16>, vector<32x32xbf16>, vector<128x32xf32> -> vector<128x32xf32>
    %102 = arith.addf %95, %101 : vector<128x32xf32>
    %103 = vector.extract_strided_slice %94 {offsets = [0, 0, 1, 0], sizes = [2, 8, 8, 32], strides = [1, 1, 1, 1]} : vector<2x10x10x32xf32> to vector<2x8x8x32xf32>
    %104 = vector.shape_cast %103 : vector<2x8x8x32xf32> to vector<128x32xf32>
    %105 = arith.truncf %104 : vector<128x32xf32> to vector<128x32xbf16>
    %c1_75 = arith.constant 1 : index
    %c0_76 = arith.constant 0 : index
    %c0_77 = arith.constant 0 : index
    %106 = vector.load %arg6[%c1_75, %c0_76, %c0_77] : memref<9x32x32xbf16, #tpu.memory_space<vmem>>, vector<1x32x32xbf16>
    %107 = vector.shape_cast %106 : vector<1x32x32xbf16> to vector<32x32xbf16>
    %cst_78 = arith.constant dense<0.000000e+00> : vector<128x32xf32>
    %108 = tpu.matmul %105, %107, %cst_78 {dimension_numbers = #tpu.dot_dimension_numbers<[1], [0], [0], [1], [0, 0, 1, 1], [], []>} : vector<128x32xbf16>, vector<32x32xbf16>, vector<128x32xf32> -> vector<128x32xf32>
    %109 = arith.addf %102, %108 : vector<128x32xf32>
    %110 = vector.extract_strided_slice %94 {offsets = [0, 0, 2, 0], sizes = [2, 8, 8, 32], strides = [1, 1, 1, 1]} : vector<2x10x10x32xf32> to vector<2x8x8x32xf32>
    %111 = vector.shape_cast %110 : vector<2x8x8x32xf32> to vector<128x32xf32>
    %112 = arith.truncf %111 : vector<128x32xf32> to vector<128x32xbf16>
    %c2_79 = arith.constant 2 : index
    %c0_80 = arith.constant 0 : index
    %c0_81 = arith.constant 0 : index
    %113 = vector.load %arg6[%c2_79, %c0_80, %c0_81] : memref<9x32x32xbf16, #tpu.memory_space<vmem>>, vector<1x32x32xbf16>
    %114 = vector.shape_cast %113 : vector<1x32x32xbf16> to vector<32x32xbf16>
    %cst_82 = arith.constant dense<0.000000e+00> : vector<128x32xf32>
    %115 = tpu.matmul %112, %114, %cst_82 {dimension_numbers = #tpu.dot_dimension_numbers<[1], [0], [0], [1], [0, 0, 1, 1], [], []>} : vector<128x32xbf16>, vector<32x32xbf16>, vector<128x32xf32> -> vector<128x32xf32>
    %116 = arith.addf %109, %115 : vector<128x32xf32>
    %117 = vector.extract_strided_slice %94 {offsets = [0, 1, 0, 0], sizes = [2, 8, 8, 32], strides = [1, 1, 1, 1]} : vector<2x10x10x32xf32> to vector<2x8x8x32xf32>
    %118 = vector.shape_cast %117 : vector<2x8x8x32xf32> to vector<128x32xf32>
    %119 = arith.truncf %118 : vector<128x32xf32> to vector<128x32xbf16>
    %c3_83 = arith.constant 3 : index
    %c0_84 = arith.constant 0 : index
    %c0_85 = arith.constant 0 : index
    %120 = vector.load %arg6[%c3_83, %c0_84, %c0_85] : memref<9x32x32xbf16, #tpu.memory_space<vmem>>, vector<1x32x32xbf16>
    %121 = vector.shape_cast %120 : vector<1x32x32xbf16> to vector<32x32xbf16>
    %cst_86 = arith.constant dense<0.000000e+00> : vector<128x32xf32>
    %122 = tpu.matmul %119, %121, %cst_86 {dimension_numbers = #tpu.dot_dimension_numbers<[1], [0], [0], [1], [0, 0, 1, 1], [], []>} : vector<128x32xbf16>, vector<32x32xbf16>, vector<128x32xf32> -> vector<128x32xf32>
    %123 = arith.addf %116, %122 : vector<128x32xf32>
    %124 = vector.extract_strided_slice %94 {offsets = [0, 1, 1, 0], sizes = [2, 8, 8, 32], strides = [1, 1, 1, 1]} : vector<2x10x10x32xf32> to vector<2x8x8x32xf32>
    %125 = vector.shape_cast %124 : vector<2x8x8x32xf32> to vector<128x32xf32>
    %126 = arith.truncf %125 : vector<128x32xf32> to vector<128x32xbf16>
    %c4_87 = arith.constant 4 : index
    %c0_88 = arith.constant 0 : index
    %c0_89 = arith.constant 0 : index
    %127 = vector.load %arg6[%c4_87, %c0_88, %c0_89] : memref<9x32x32xbf16, #tpu.memory_space<vmem>>, vector<1x32x32xbf16>
    %128 = vector.shape_cast %127 : vector<1x32x32xbf16> to vector<32x32xbf16>
    %cst_90 = arith.constant dense<0.000000e+00> : vector<128x32xf32>
    %129 = tpu.matmul %126, %128, %cst_90 {dimension_numbers = #tpu.dot_dimension_numbers<[1], [0], [0], [1], [0, 0, 1, 1], [], []>} : vector<128x32xbf16>, vector<32x32xbf16>, vector<128x32xf32> -> vector<128x32xf32>
    %130 = arith.addf %123, %129 : vector<128x32xf32>
    %131 = vector.extract_strided_slice %94 {offsets = [0, 1, 2, 0], sizes = [2, 8, 8, 32], strides = [1, 1, 1, 1]} : vector<2x10x10x32xf32> to vector<2x8x8x32xf32>
    %132 = vector.shape_cast %131 : vector<2x8x8x32xf32> to vector<128x32xf32>
    %133 = arith.truncf %132 : vector<128x32xf32> to vector<128x32xbf16>
    %c5_91 = arith.constant 5 : index
    %c0_92 = arith.constant 0 : index
    %c0_93 = arith.constant 0 : index
    %134 = vector.load %arg6[%c5_91, %c0_92, %c0_93] : memref<9x32x32xbf16, #tpu.memory_space<vmem>>, vector<1x32x32xbf16>
    %135 = vector.shape_cast %134 : vector<1x32x32xbf16> to vector<32x32xbf16>
    %cst_94 = arith.constant dense<0.000000e+00> : vector<128x32xf32>
    %136 = tpu.matmul %133, %135, %cst_94 {dimension_numbers = #tpu.dot_dimension_numbers<[1], [0], [0], [1], [0, 0, 1, 1], [], []>} : vector<128x32xbf16>, vector<32x32xbf16>, vector<128x32xf32> -> vector<128x32xf32>
    %137 = arith.addf %130, %136 : vector<128x32xf32>
    %138 = vector.extract_strided_slice %94 {offsets = [0, 2, 0, 0], sizes = [2, 8, 8, 32], strides = [1, 1, 1, 1]} : vector<2x10x10x32xf32> to vector<2x8x8x32xf32>
    %139 = vector.shape_cast %138 : vector<2x8x8x32xf32> to vector<128x32xf32>
    %140 = arith.truncf %139 : vector<128x32xf32> to vector<128x32xbf16>
    %c6_95 = arith.constant 6 : index
    %c0_96 = arith.constant 0 : index
    %c0_97 = arith.constant 0 : index
    %141 = vector.load %arg6[%c6_95, %c0_96, %c0_97] : memref<9x32x32xbf16, #tpu.memory_space<vmem>>, vector<1x32x32xbf16>
    %142 = vector.shape_cast %141 : vector<1x32x32xbf16> to vector<32x32xbf16>
    %cst_98 = arith.constant dense<0.000000e+00> : vector<128x32xf32>
    %143 = tpu.matmul %140, %142, %cst_98 {dimension_numbers = #tpu.dot_dimension_numbers<[1], [0], [0], [1], [0, 0, 1, 1], [], []>} : vector<128x32xbf16>, vector<32x32xbf16>, vector<128x32xf32> -> vector<128x32xf32>
    %144 = arith.addf %137, %143 : vector<128x32xf32>
    %145 = vector.extract_strided_slice %94 {offsets = [0, 2, 1, 0], sizes = [2, 8, 8, 32], strides = [1, 1, 1, 1]} : vector<2x10x10x32xf32> to vector<2x8x8x32xf32>
    %146 = vector.shape_cast %145 : vector<2x8x8x32xf32> to vector<128x32xf32>
    %147 = arith.truncf %146 : vector<128x32xf32> to vector<128x32xbf16>
    %c7_99 = arith.constant 7 : index
    %c0_100 = arith.constant 0 : index
    %c0_101 = arith.constant 0 : index
    %148 = vector.load %arg6[%c7_99, %c0_100, %c0_101] : memref<9x32x32xbf16, #tpu.memory_space<vmem>>, vector<1x32x32xbf16>
    %149 = vector.shape_cast %148 : vector<1x32x32xbf16> to vector<32x32xbf16>
    %cst_102 = arith.constant dense<0.000000e+00> : vector<128x32xf32>
    %150 = tpu.matmul %147, %149, %cst_102 {dimension_numbers = #tpu.dot_dimension_numbers<[1], [0], [0], [1], [0, 0, 1, 1], [], []>} : vector<128x32xbf16>, vector<32x32xbf16>, vector<128x32xf32> -> vector<128x32xf32>
    %151 = arith.addf %144, %150 : vector<128x32xf32>
    %152 = vector.extract_strided_slice %94 {offsets = [0, 2, 2, 0], sizes = [2, 8, 8, 32], strides = [1, 1, 1, 1]} : vector<2x10x10x32xf32> to vector<2x8x8x32xf32>
    %153 = vector.shape_cast %152 : vector<2x8x8x32xf32> to vector<128x32xf32>
    %154 = arith.truncf %153 : vector<128x32xf32> to vector<128x32xbf16>
    %c8_103 = arith.constant 8 : index
    %c0_104 = arith.constant 0 : index
    %c0_105 = arith.constant 0 : index
    %155 = vector.load %arg6[%c8_103, %c0_104, %c0_105] : memref<9x32x32xbf16, #tpu.memory_space<vmem>>, vector<1x32x32xbf16>
    %156 = vector.shape_cast %155 : vector<1x32x32xbf16> to vector<32x32xbf16>
    %cst_106 = arith.constant dense<0.000000e+00> : vector<128x32xf32>
    %157 = tpu.matmul %154, %156, %cst_106 {dimension_numbers = #tpu.dot_dimension_numbers<[1], [0], [0], [1], [0, 0, 1, 1], [], []>} : vector<128x32xbf16>, vector<32x32xbf16>, vector<128x32xf32> -> vector<128x32xf32>
    %158 = arith.addf %151, %157 : vector<128x32xf32>
    %159 = vector.shape_cast %158 : vector<128x32xf32> to vector<2x64x32xf32>
    %cst_107 = arith.constant dense<0.000000e+00> : vector<2x32xf32>
    %160 = vector.multi_reduction <add>, %159, %cst_107 [1] : vector<2x64x32xf32> to vector<2x32xf32>
    %cst_108 = arith.constant 6.400000e+01 : f32
    %161 = vector.broadcast %cst_108 : f32 to vector<2x32xf32>
    %162 = arith.divf %160, %161 : vector<2x32xf32>
    %c0_109 = arith.constant 0 : index
    %c0_110 = arith.constant 0 : index
    %163 = vector.load %arg8[%c0_109, %c0_110] : memref<32x2xf32, #tpu.memory_space<vmem>>, vector<32x2xf32>
    %cst_111 = arith.constant dense<0.000000e+00> : vector<2x2xf32>
    %164 = tpu.matmul %162, %163, %cst_111 {dimension_numbers = #tpu.dot_dimension_numbers<[1], [0], [0], [1], [0, 0, 1, 1], [], []>} : vector<2x32xf32>, vector<32x2xf32>, vector<2x2xf32> -> vector<2x2xf32>
    %cst_112 = arith.constant 0.000000e+00 : f32
    %165 = vector.broadcast %cst_112 : f32 to vector<2x2xf32>
    %166 = arith.maximumf %164, %165 : vector<2x2xf32>
    %c0_113 = arith.constant 0 : index
    %c0_114 = arith.constant 0 : index
    %167 = vector.load %arg9[%c0_113, %c0_114] : memref<2x32xf32, #tpu.memory_space<vmem>>, vector<2x32xf32>
    %cst_115 = arith.constant dense<0.000000e+00> : vector<2x32xf32>
    %168 = tpu.matmul %166, %167, %cst_115 {dimension_numbers = #tpu.dot_dimension_numbers<[1], [0], [0], [1], [0, 0, 1, 1], [], []>} : vector<2x2xf32>, vector<2x32xf32>, vector<2x32xf32> -> vector<2x32xf32>
    %169 = arith.negf %168 : vector<2x32xf32>
    %170 = math.exp %169 : vector<2x32xf32>
    %cst_116 = arith.constant 1.000000e+00 : f32
    %171 = vector.broadcast %cst_116 : f32 to vector<2x32xf32>
    %172 = arith.addf %171, %170 : vector<2x32xf32>
    %173 = arith.divf %171, %172 : vector<2x32xf32>
    %174 = vector.shape_cast %173 : vector<2x32xf32> to vector<2x1x32xf32>
    %175 = vector.broadcast %174 : vector<2x1x32xf32> to vector<2x64x32xf32>
    %176 = arith.mulf %159, %175 : vector<2x64x32xf32>
    %177 = vector.shape_cast %16 : vector<128x32xf32> to vector<2x64x32xf32>
    %178 = arith.addf %176, %177 : vector<2x64x32xf32>
    %c0_117 = arith.constant 0 : index
    %c0_118 = arith.constant 0 : index
    %c0_119 = arith.constant 0 : index
    %179 = vector.load %arg10[%c0_117, %c0_118, %c0_119] : memref<2x64x32xf32, #tpu.memory_space<vmem>>, vector<2x64x32xf32>
    tpu.vector_store %arg10[%c0_117, %c0_118, %c0_119], %178 {strides = array<i32>} : memref<2x64x32xf32, #tpu.memory_space<vmem>>, vector<2x64x32xf32>,
    return
  }
}

</mosaic_0001>

<llo_original>
// kernel: tpu_custom_call.1
$region0: #{tpu_custom_call.1}
  #allocation0 [shape = 'u32[]', space=smem, size = 0x4, offset = 0x4, fixed_abs, tag = 'smem constant byte address 0x4 - core index']
  #allocation1 [shape = 'u32[72,128]{1,0:T(1,128)}', space=vmem, size = 0x9000, scoped, tag = 'internal scratch']
  #allocation2 [shape = 'f32[2,10,10,16]{3,2,1,0:T(8,128)}', space=vmem, size = 0x28000, scoped, tag = 'scratch operand']
  #allocation3 [shape = 'f32[2,10,10,32]{3,2,1,0:T(8,128)}', space=vmem, size = 0x28000, scoped, tag = 'scratch operand']
  %s0 = inlined_call_operand.hbm [shape: f32[2,8,8,16], index: 0, kind: input, shape index: {}]
  %s1 = inlined_call_operand.vmem [shape: f32[1,16], index: 1, kind: input, shape index: {}]
  %s2 = inlined_call_operand.vmem [shape: f32[1,16], index: 2, kind: input, shape index: {}]
  %s3 = inlined_call_operand.vmem [shape: f32[1,32], index: 3, kind: input, shape index: {}]
  %s4 = inlined_call_operand.vmem [shape: f32[1,32], index: 4, kind: input, shape index: {}]
  %s5 = inlined_call_operand.hbm [shape: bf16[9,16,32], index: 5, kind: input, shape index: {}]
  %s6 = inlined_call_operand.hbm [shape: bf16[9,32,32], index: 6, kind: input, shape index: {}]
  %s7 = inlined_call_operand.vmem [shape: bf16[16,32], index: 7, kind: input, shape index: {}]
  %s8 = inlined_call_operand.vmem [shape: f32[32,2], index: 8, kind: input, shape index: {}]
  %s9 = inlined_call_operand.vmem [shape: f32[2,32], index: 9, kind: input, shape index: {}]
  %s10 = inlined_call_operand.vmem [shape: f32[2,64,32], index: 10, kind: output, shape index: {}]
  %s11 = sld [smem:[#allocation0]]
  $region62: #{tpu_custom_call.1} parent=0
    _
  %s13 = ssub.s32 1, %s11
  %s14 = scalar_select 0, %s13, %s11
  $region1: #{tpu_custom_call.1} parent=0
    #allocation4 [shape = 'u8[65536]{0}', space=vmem, size = 0x10000, scoped, tag = 'input window, operand 0, single buffered']
    #allocation5 [shape = 's32[1]{0}', space=sflag, size = 0x4, scoped, tag = 'scoped memory for tpu_custom_call.1']
    #allocation6 [shape = 'u8[36864]{0}', space=vmem, size = 0x9000, scoped, tag = 'input window, operand 5, single buffered']
    #allocation7 [shape = 's32[1]{0}', space=sflag, size = 0x4, scoped, tag = 'scoped memory for tpu_custom_call.1']
    #allocation8 [shape = 'u8[73728]{0}', space=vmem, size = 0x12000, scoped, tag = 'input window, operand 6, single buffered']
    %15 = vsyncpa [#allocation5], 0
    %16 = vsyncpa [#allocation7], 0
    // Predicated region
    $region2: #{tpu_custom_call.1} parent=1 // pred_check
      _
    $region3: #{tpu_custom_call.1} parent=1 // pred_check_branch
      %18 = sbr.rel (0) target = $region5
    $region4: #{tpu_custom_call.1} parent=1 // pred_region
      %20 = vsyncadd [#allocation5], 0
      %s21 = sshll.u32 %s0, 4
      %s22 = int_to_ptr.hbm [resolvable:$true] %s21
      %s23 = sshll.u32 [#allocation4], 4
      %s24 = int_to_ptr.vmem [resolvable:$true] %s23
      %29 = dma.hbm_to_vmem [thread:$0]  %s22, 2048, %s24, [#allocation5], 128, 128, 8
    $region5: #{tpu_custom_call.1} parent=1 // pred_fallthru
      _
    // Predicated region
    $region6: #{tpu_custom_call.1} parent=1 // pred_check
      _
    $region7: #{tpu_custom_call.1} parent=1 // pred_check_branch
      %31 = sbr.rel (0) target = $region9
    $region8: #{tpu_custom_call.1} parent=1 // pred_region
      _
    $region9: #{tpu_custom_call.1} parent=1 // pred_fallthru
      _
    // Predicated region
    $region10: #{tpu_custom_call.1} parent=1 // pred_check
      _
    $region11: #{tpu_custom_call.1} parent=1 // pred_check_branch
      %33 = sbr.rel (0) target = $region13
    $region12: #{tpu_custom_call.1} parent=1 // pred_region
      _
    $region13: #{tpu_custom_call.1} parent=1 // pred_fallthru
      _
    // Predicated region
    $region14: #{tpu_custom_call.1} parent=1 // pred_check
      _
    $region15: #{tpu_custom_call.1} parent=1 // pred_check_branch
      %35 = sbr.rel (0) target = $region17
    $region16: #{tpu_custom_call.1} parent=1 // pred_region
      _
    $region17: #{tpu_custom_call.1} parent=1 // pred_fallthru
      _
    // Predicated region
    $region18: #{tpu_custom_call.1} parent=1 // pred_check
      _
    $region19: #{tpu_custom_call.1} parent=1 // pred_check_branch
      %37 = sbr.rel (0) target = $region21
    $region20: #{tpu_custom_call.1} parent=1 // pred_region
      _
    $region21: #{tpu_custom_call.1} parent=1 // pred_fallthru
      _
    // Predicated region
    $region22: #{tpu_custom_call.1} parent=1 // pred_check
      _
    $region23: #{tpu_custom_call.1} parent=1 // pred_check_branch
      %39 = sbr.rel (0) target = $region25
    $region24: #{tpu_custom_call.1} parent=1 // pred_region
      %41 = vsyncadd [#allocation7], 0
      %s42 = sshll.u32 %s5, 4
      %s43 = int_to_ptr.hbm [resolvable:$true] %s42
      %s44 = sshll.u32 [#allocation6], 4
      %s45 = int_to_ptr.vmem [resolvable:$true] %s44
      %50 = dma.hbm_to_vmem [thread:$0]  %s43, 1152, %s45, [#allocation7], 64, 64, 4
    $region25: #{tpu_custom_call.1} parent=1 // pred_fallthru
      _
    // Predicated region
    $region26: #{tpu_custom_call.1} parent=1 // pred_check
      _
    $region27: #{tpu_custom_call.1} parent=1 // pred_check_branch
      %52 = sbr.rel (0) target = $region29
    $region28: #{tpu_custom_call.1} parent=1 // pred_region
      %54 = vsyncadd [#allocation7], 0
      %s55 = sshll.u32 %s6, 4
      %s56 = int_to_ptr.hbm [resolvable:$true] %s55
      %s57 = sshll.u32 [#allocation8], 4
      %s58 = int_to_ptr.vmem [resolvable:$true] %s57
      %63 = dma.hbm_to_vmem [thread:$0]  %s56, 2304, %s58, [#allocation7], 64, 64, 4
    $region29: #{tpu_custom_call.1} parent=1 // pred_fallthru
      _
    // Predicated region
    $region30: #{tpu_custom_call.1} parent=1 // pred_check
      _
    $region31: #{tpu_custom_call.1} parent=1 // pred_check_branch
      %65 = sbr.rel (0) target = $region33
    $region32: #{tpu_custom_call.1} parent=1 // pred_region
      _
    $region33: #{tpu_custom_call.1} parent=1 // pred_fallthru
      _
    // Predicated region
    $region34: #{tpu_custom_call.1} parent=1 // pred_check
      _
    $region35: #{tpu_custom_call.1} parent=1 // pred_check_branch
      %67 = sbr.rel (0) target = $region37
    $region36: #{tpu_custom_call.1} parent=1 // pred_region
      _
    $region37: #{tpu_custom_call.1} parent=1 // pred_fallthru
      _
    // Predicated region
    $region38: #{tpu_custom_call.1} parent=1 // pred_check
      _
    $region39: #{tpu_custom_call.1} parent=1 // pred_check_branch
      %69 = sbr.rel (0) target = $region41
    $region40: #{tpu_custom_call.1} parent=1 // pred_region
      _
    $region41: #{tpu_custom_call.1} parent=1 // pred_fallthru
      _
    // Predicated region
    $region42: #{tpu_custom_call.1} parent=1 // pred_check
      _
    $region43: #{tpu_custom_call.1} parent=1 // pred_check_branch
      %71 = sbr.rel (0) target = $region45
    $region44: #{tpu_custom_call.1} parent=1 // pred_region
      %73 = dma.done [#allocation5], 2048
    $region45: #{tpu_custom_call.1} parent=1 // pred_fallthru
      _
    // Predicated region
    $region46: #{tpu_custom_call.1} parent=1 // pred_check
      _
    $region47: #{tpu_custom_call.1} parent=1 // pred_check_branch
      %75 = sbr.rel (0) target = $region49
    $region48: #{tpu_custom_call.1} parent=1 // pred_region
      %77 = dma.done [#allocation7], 1152
    $region49: #{tpu_custom_call.1} parent=1 // pred_fallthru
      _
    // Predicated region
    $region50: #{tpu_custom_call.1} parent=1 // pred_check
      _
    $region51: #{tpu_custom_call.1} parent=1 // pred_check_branch
      %79 = sbr.rel (0) target = $region53
    $region52: #{tpu_custom_call.1} parent=1 // pred_region
      %81 = dma.done [#allocation7], 2304
    $region53: #{tpu_custom_call.1} parent=1 // pred_fallthru
      _
    %v83 = vld [vmem:[#allocation4] sm:$0xff]
    %v84 = vld [vmem:[#allocation4 + $0x8] sm:$0xff]
    %v85 = vld [vmem:[#allocation4 + $0x10] sm:$0xff]
    %v86 = vld [vmem:[#allocation4 + $0x18] sm:$0xff]
    %v87 = vld [vmem:[#allocation4 + $0x20] sm:$0xff]
    %v88 = vld [vmem:[#allocation4 + $0x28] sm:$0xff]
    %v89 = vld [vmem:[#allocation4 + $0x30] sm:$0xff]
    %v90 = vld [vmem:[#allocation4 + $0x38] sm:$0xff]
    %v91 = vld [vmem:[#allocation4 + $0x40] sm:$0xff]
    %v92 = vld [vmem:[#allocation4 + $0x48] sm:$0xff]
    %v93 = vld [vmem:[#allocation4 + $0x50] sm:$0xff]
    %v94 = vld [vmem:[#allocation4 + $0x58] sm:$0xff]
    %v95 = vld [vmem:[#allocation4 + $0x60] sm:$0xff]
    %v96 = vld [vmem:[#allocation4 + $0x68] sm:$0xff]
    %v97 = vld [vmem:[#allocation4 + $0x70] sm:$0xff]
    %v98 = vld [vmem:[#allocation4 + $0x78] sm:$0xff]
    %v99 = vld [vmem:[%s1] sm:$0x1]
    %v101 = vperm.slane %v99, 0
    %v103 = vmul.f32 %v83, %v101
    %v104 = vmul.f32 %v84, %v101
    %v105 = vmul.f32 %v85, %v101
    %v106 = vmul.f32 %v86, %v101
    %v107 = vmul.f32 %v87, %v101
    %v108 = vmul.f32 %v88, %v101
    %v109 = vmul.f32 %v89, %v101
    %v110 = vmul.f32 %v90, %v101
    %v111 = vmul.f32 %v91, %v101
    %v112 = vmul.f32 %v92, %v101
    %v113 = vmul.f32 %v93, %v101
    %v114 = vmul.f32 %v94, %v101
    %v115 = vmul.f32 %v95, %v101
    %v116 = vmul.f32 %v96, %v101
    %v117 = vmul.f32 %v97, %v101
    %v118 = vmul.f32 %v98, %v101
    %v119 = vld [vmem:[%s2] sm:$0x1]
    %v121 = vperm.slane %v119, 0
    %v123 = vadd.f32 %v103, %v121
    %v124 = vadd.f32 %v104, %v121
    %v125 = vadd.f32 %v105, %v121
    %v126 = vadd.f32 %v106, %v121
    %v127 = vadd.f32 %v107, %v121
    %v128 = vadd.f32 %v108, %v121
    %v129 = vadd.f32 %v109, %v121
    %v130 = vadd.f32 %v110, %v121
    %v131 = vadd.f32 %v111, %v121
    %v132 = vadd.f32 %v112, %v121
    %v133 = vadd.f32 %v113, %v121
    %v134 = vadd.f32 %v114, %v121
    %v135 = vadd.f32 %v115, %v121
    %v136 = vadd.f32 %v116, %v121
    %v137 = vadd.f32 %v117, %v121
    %v138 = vadd.f32 %v118, %v121
    %v139 = vmax.f32 %v123, 0.0
    %v140 = vmax.f32 %v124, 0.0
    %v141 = vmax.f32 %v125, 0.0
    %v142 = vmax.f32 %v126, 0.0
    %v143 = vmax.f32 %v127, 0.0
    %v144 = vmax.f32 %v128, 0.0
    %v145 = vmax.f32 %v129, 0.0
    %v146 = vmax.f32 %v130, 0.0
    %v147 = vmax.f32 %v131, 0.0
    %v148 = vmax.f32 %v132, 0.0
    %v149 = vmax.f32 %v133, 0.0
    %v150 = vmax.f32 %v134, 0.0
    %v151 = vmax.f32 %v135, 0.0
    %v152 = vmax.f32 %v136, 0.0
    %v153 = vmax.f32 %v137, 0.0
    %v154 = vmax.f32 %v138, 0.0
    %vm155 = vcmask 130048
    %156 = vst.msk [vmem:[#allocation2] sm:$0xff] %vm155, 0.0
    %vm157 = vcmask 123904
    %158 = vst.msk [vmem:[#allocation2 + $0x8] sm:$0x3] %vm157, 0.0
    %159 = vst.msk [vmem:[#allocation2 + $0x10] sm:$0xff] %vm155, 0.0
    %160 = vst.msk [vmem:[#allocation2 + $0x18] sm:$0x3] %vm157, 0.0
    %161 = vst.msk [vmem:[#allocation2 + $0x20] sm:$0xff] %vm155, 0.0
    %162 = vst.msk [vmem:[#allocation2 + $0x28] sm:$0x3] %vm157, 0.0
    %163 = vst.msk [vmem:[#allocation2 + $0x30] sm:$0xff] %vm155, 0.0
    %164 = vst.msk [vmem:[#allocation2 + $0x38] sm:$0x3] %vm157, 0.0
    %165 = vst.msk [vmem:[#allocation2 + $0x40] sm:$0xff] %vm155, 0.0
    %166 = vst.msk [vmem:[#allocation2 + $0x48] sm:$0x3] %vm157, 0.0
    %167 = vst.msk [vmem:[#allocation2 + $0x50] sm:$0xff] %vm155, 0.0
    %168 = vst.msk [vmem:[#allocation2 + $0x58] sm:$0x3] %vm157, 0.0
    %169 = vst.msk [vmem:[#allocation2 + $0x60] sm:$0xff] %vm155, 0.0
    %170 = vst.msk [vmem:[#allocation2 + $0x68] sm:$0x3] %vm157, 0.0
    %171 = vst.msk [vmem:[#allocation2 + $0x70] sm:$0xff] %vm155, 0.0
    %172 = vst.msk [vmem:[#allocation2 + $0x78] sm:$0x3] %vm157, 0.0
    %173 = vst.msk [vmem:[#allocation2 + $0x80] sm:$0xff] %vm155, 0.0
    %174 = vst.msk [vmem:[#allocation2 + $0x88] sm:$0x3] %vm157, 0.0
    %175 = vst.msk [vmem:[#allocation2 + $0x90] sm:$0xff] %vm155, 0.0
    %176 = vst.msk [vmem:[#allocation2 + $0x98] sm:$0x3] %vm157, 0.0
    %177 = vst.msk [vmem:[#allocation2 + $0xa0] sm:$0xff] %vm155, 0.0
    %178 = vst.msk [vmem:[#allocation2 + $0xa8] sm:$0x3] %vm157, 0.0
    %179 = vst.msk [vmem:[#allocation2 + $0xb0] sm:$0xff] %vm155, 0.0
    %180 = vst.msk [vmem:[#allocation2 + $0xb8] sm:$0x3] %vm157, 0.0
    %181 = vst.msk [vmem:[#allocation2 + $0xc0] sm:$0xff] %vm155, 0.0
    %182 = vst.msk [vmem:[#allocation2 + $0xc8] sm:$0x3] %vm157, 0.0
    %183 = vst.msk [vmem:[#allocation2 + $0xd0] sm:$0xff] %vm155, 0.0
    %184 = vst.msk [vmem:[#allocation2 + $0xd8] sm:$0x3] %vm157, 0.0
    %185 = vst.msk [vmem:[#allocation2 + $0xe0] sm:$0xff] %vm155, 0.0
    %186 = vst.msk [vmem:[#allocation2 + $0xe8] sm:$0x3] %vm157, 0.0
    %187 = vst.msk [vmem:[#allocation2 + $0xf0] sm:$0xff] %vm155, 0.0
    %188 = vst.msk [vmem:[#allocation2 + $0xf8] sm:$0x3] %vm157, 0.0
    %189 = vst.msk [vmem:[#allocation2 + $0x100] sm:$0xff] %vm155, 0.0
    %190 = vst.msk [vmem:[#allocation2 + $0x108] sm:$0x3] %vm157, 0.0
    %191 = vst.msk [vmem:[#allocation2 + $0x110] sm:$0xff] %vm155, 0.0
    %192 = vst.msk [vmem:[#allocation2 + $0x118] sm:$0x3] %vm157, 0.0
    %193 = vst.msk [vmem:[#allocation2 + $0x120] sm:$0xff] %vm155, 0.0
    %194 = vst.msk [vmem:[#allocation2 + $0x128] sm:$0x3] %vm157, 0.0
    %195 = vst.msk [vmem:[#allocation2 + $0x130] sm:$0xff] %vm155, 0.0
    %196 = vst.msk [vmem:[#allocation2 + $0x138] sm:$0x3] %vm157, 0.0
    %s197 = scalar_lea.vmem [#allocation2], 16
    %198 = vst.msk [vmem:[%s197 + $0x1] sm:$0xff] %vm155, %v139
    %199 = vst.msk [vmem:[%s197 + $0x11] sm:$0xff] %vm155, %v140
    %200 = vst.msk [vmem:[%s197 + $0x21] sm:$0xff] %vm155, %v141
    %201 = vst.msk [vmem:[%s197 + $0x31] sm:$0xff] %vm155, %v142
    %202 = vst.msk [vmem:[%s197 + $0x41] sm:$0xff] %vm155, %v143
    %203 = vst.msk [vmem:[%s197 + $0x51] sm:$0xff] %vm155, %v144
    %204 = vst.msk [vmem:[%s197 + $0x61] sm:$0xff] %vm155, %v145
    %205 = vst.msk [vmem:[%s197 + $0x71] sm:$0xff] %vm155, %v146
    %206 = vst.msk [vmem:[%s197 + $0xa1] sm:$0xff] %vm155, %v147
    %207 = vst.msk [vmem:[%s197 + $0xb1] sm:$0xff] %vm155, %v148
    %208 = vst.msk [vmem:[%s197 + $0xc1] sm:$0xff] %vm155, %v149
    %209 = vst.msk [vmem:[%s197 + $0xd1] sm:$0xff] %vm155, %v150
    %210 = vst.msk [vmem:[%s197 + $0xe1] sm:$0xff] %vm155, %v151
    %211 = vst.msk [vmem:[%s197 + $0xf1] sm:$0xff] %vm155, %v152
    %212 = vst.msk [vmem:[%s197 + $0x101] sm:$0xff] %vm155, %v153
    %213 = vst.msk [vmem:[%s197 + $0x111] sm:$0xff] %vm155, %v154
    %v214 = vpack.c.bf16 %v140, %v139
    %v215 = vpack.c.bf16 %v142, %v141
    %v216 = vpack.c.bf16 %v144, %v143
    %v217 = vpack.c.bf16 %v146, %v145
    %v218 = vpack.c.bf16 %v148, %v147
    %v219 = vpack.c.bf16 %v150, %v149
    %v220 = vpack.c.bf16 %v152, %v151
    %v221 = vpack.c.bf16 %v154, %v153
    %v222 = vld [vmem:[%s7] sm:$0xf]
    %v223 = vld [vmem:[%s7 + $0x4] sm:$0xf]
    %v226 = vunpack.c.l.b16 %v222
    %v227 = vunpack.c.l.b16 %v223
    %v228 = vpack.c.b16 %v227, %v226
    %v231 = vsel %vm155, %v214, 0
    %v234 = vsel %vm155, %v215, 0
    %v237 = vsel %vm155, %v216, 0
    %v240 = vsel %vm155, %v217, 0
    %v243 = vsel %vm155, %v218, 0
    %v246 = vsel %vm155, %v219, 0
    %v249 = vsel %vm155, %v220, 0
    %v252 = vsel %vm155, %v221, 0
    %254 = vmatpush.bf16.msra.mxu0 0
    %255 = vmatpush.bf16.msra.mxu0 0
    %256 = vmatpush.bf16.msra.mxu0 0
    %257 = vmatpush.bf16.msra.mxu0 0
    %258 = vmatpush.bf16.msra.mxu0 0
    %259 = vmatpush.bf16.msra.mxu0 0
    %260 = vmatpush.bf16.msra.mxu0 0
    %261 = vmatpush.bf16.msra.mxu0 %v228
    %262 = vmatmul.bf16.gmra.mxu0 %v231
    %v263 = vpop.f32.mrf.mxu0
    %v264 = vadd.f32 0.0, %v263
    %v265 = vpop.f32.mrf.mxu0
    %v266 = vadd.f32 0.0, %v265
    %267 = vmatmul.bf16.gmra.mxu0 %v234
    %v268 = vpop.f32.mrf.mxu0
    %v269 = vadd.f32 0.0, %v268
    %v270 = vpop.f32.mrf.mxu0
    %v271 = vadd.f32 0.0, %v270
    %272 = vmatmul.bf16.gmra.mxu0 %v237
    %v273 = vpop.f32.mrf.mxu0
    %v274 = vadd.f32 0.0, %v273
    %v275 = vpop.f32.mrf.mxu0
    %v276 = vadd.f32 0.0, %v275
    %277 = vmatmul.bf16.gmra.mxu0 %v240
    %v278 = vpop.f32.mrf.mxu0
    %v279 = vadd.f32 0.0, %v278
    %v280 = vpop.f32.mrf.mxu0
    %v281 = vadd.f32 0.0, %v280
    %282 = vmatmul.bf16.gmra.mxu0 %v243
    %v283 = vpop.f32.mrf.mxu0
    %v284 = vadd.f32 0.0, %v283
    %v285 = vpop.f32.mrf.mxu0
    %v286 = vadd.f32 0.0, %v285
    %287 = vmatmul.bf16.gmra.mxu0 %v246
    %v288 = vpop.f32.mrf.mxu0
    %v289 = vadd.f32 0.0, %v288
    %v290 = vpop.f32.mrf.mxu0
    %v291 = vadd.f32 0.0, %v290
    %292 = vmatmul.bf16.gmra.mxu0 %v249
    %v293 = vpop.f32.mrf.mxu0
    %v294 = vadd.f32 0.0, %v293
    %v295 = vpop.f32.mrf.mxu0
    %v296 = vadd.f32 0.0, %v295
    %297 = vmatmul.bf16.gmra.mxu0 %v252
    %v298 = vpop.f32.mrf.mxu0
    %v299 = vadd.f32 0.0, %v298
    %v300 = vpop.f32.mrf.mxu0
    %v301 = vadd.f32 0.0, %v300
    %302 = vdwg.mxu0
    %v303 = vld [vmem:[#allocation2] sm:$0xff]
    %v304 = vld [vmem:[#allocation2 + $0x8] sm:$0x3]
    %v305 = vld [vmem:[#allocation2 + $0x10] sm:$0xff]
    %v306 = vld [vmem:[#allocation2 + $0x18] sm:$0x3]
    %v307 = vld [vmem:[#allocation2 + $0x20] sm:$0xff]
    %v308 = vld [vmem:[#allocation2 + $0x28] sm:$0x3]
    %v309 = vld [vmem:[#allocation2 + $0x30] sm:$0xff]
    %v310 = vld [vmem:[#allocation2 + $0x38] sm:$0x3]
    %v311 = vld [vmem:[#allocation2 + $0x40] sm:$0xff]
    %v312 = vld [vmem:[#allocation2 + $0x48] sm:$0x3]
    %v313 = vld [vmem:[#allocation2 + $0x50] sm:$0xff]
    %v314 = vld [vmem:[#allocation2 + $0x58] sm:$0x3]
    %v315 = vld [vmem:[#allocation2 + $0x60] sm:$0xff]
    %v316 = vld [vmem:[#allocation2 + $0x68] sm:$0x3]
    %v317 = vld [vmem:[#allocation2 + $0x70] sm:$0xff]
    %v318 = vld [vmem:[#allocation2 + $0x78] sm:$0x3]
    %v319 = vld [vmem:[#allocation2 + $0x80] sm:$0xff]
    %v320 = vld [vmem:[#allocation2 + $0x88] sm:$0x3]
    %v321 = vld [vmem:[#allocation2 + $0x90] sm:$0xff]
    %v322 = vld [vmem:[#allocation2 + $0x98] sm:$0x3]
    %v323 = vld [vmem:[#allocation2 + $0xa0] sm:$0xff]
    %v324 = vld [vmem:[#allocation2 + $0xa8] sm:$0x3]
    %v325 = vld [vmem:[#allocation2 + $0xb0] sm:$0xff]
    %v326 = vld [vmem:[#allocation2 + $0xb8] sm:$0x3]
    %v327 = vld [vmem:[#allocation2 + $0xc0] sm:$0xff]
    %v328 = vld [vmem:[#allocation2 + $0xc8] sm:$0x3]
    %v329 = vld [vmem:[#allocation2 + $0xd0] sm:$0xff]
    %v330 = vld [vmem:[#allocation2 + $0xd8] sm:$0x3]
    %v331 = vld [vmem:[#allocation2 + $0xe0] sm:$0xff]
    %v332 = vld [vmem:[#allocation2 + $0xe8] sm:$0x3]
    %v333 = vld [vmem:[#allocation2 + $0xf0] sm:$0xff]
    %v334 = vld [vmem:[#allocation2 + $0xf8] sm:$0x3]
    %v335 = vld [vmem:[#allocation2 + $0x100] sm:$0xff]
    %v336 = vld [vmem:[#allocation2 + $0x108] sm:$0x3]
    %v337 = vld [vmem:[#allocation2 + $0x110] sm:$0xff]
    %v338 = vld [vmem:[#allocation2 + $0x118] sm:$0x3]
    %v339 = vld [vmem:[#allocation2 + $0x120] sm:$0xff]
    %v340 = vld [vmem:[#allocation2 + $0x128] sm:$0x3]
    %v341 = vld [vmem:[#allocation2 + $0x130] sm:$0xff]
    %v342 = vld [vmem:[#allocation2 + $0x138] sm:$0x3]
    %v343 = vpack.c.bf16 %v305, %v303
    %v344 = vpack.c.bf16 %v309, %v307
    %v345 = vpack.c.bf16 %v313, %v311
    %v346 = vpack.c.bf16 %v317, %v315
    %v347 = vpack.c.bf16 %v325, %v323
    %v348 = vpack.c.bf16 %v329, %v327
    %v349 = vpack.c.bf16 %v333, %v331
    %v350 = vpack.c.bf16 %v337, %v335
    %v351 = vld [vmem:[#allocation6] sm:$0xf]
    %v352 = vld [vmem:[#allocation6 + $0x4] sm:$0xf]
    %vm385 = vcmask 1046528
    %v386 = vrot.slane %v303, 1
    %v387 = vrot.slane %v304, 1
    %v388 = vsel %vm385, %v386, %v387
    %v389 = vrot.slane %v305, 1
    %v390 = vrot.slane %v306, 1
    %v391 = vsel %vm385, %v389, %v390
    %v392 = vrot.slane %v307, 1
    %v393 = vrot.slane %v308, 1
    %v394 = vsel %vm385, %v392, %v393
    %v395 = vrot.slane %v309, 1
    %v396 = vrot.slane %v310, 1
    %v397 = vsel %vm385, %v395, %v396
    %v398 = vrot.slane %v311, 1
    %v399 = vrot.slane %v312, 1
    %v400 = vsel %vm385, %v398, %v399
    %v401 = vrot.slane %v313, 1
    %v402 = vrot.slane %v314, 1
    %v403 = vsel %vm385, %v401, %v402
    %v404 = vrot.slane %v315, 1
    %v405 = vrot.slane %v316, 1
    %v406 = vsel %vm385, %v404, %v405
    %v407 = vrot.slane %v317, 1
    %v408 = vrot.slane %v318, 1
    %v409 = vsel %vm385, %v407, %v408
    %v410 = vrot.slane %v323, 1
    %v411 = vrot.slane %v324, 1
    %v412 = vsel %vm385, %v410, %v411
    %v413 = vrot.slane %v325, 1
    %v414 = vrot.slane %v326, 1
    %v415 = vsel %vm385, %v413, %v414
    %v416 = vrot.slane %v327, 1
    %v417 = vrot.slane %v328, 1
    %v418 = vsel %vm385, %v416, %v417
    %v419 = vrot.slane %v329, 1
    %v420 = vrot.slane %v330, 1
    %v421 = vsel %vm385, %v419, %v420
    %v422 = vrot.slane %v331, 1
    %v423 = vrot.slane %v332, 1
    %v424 = vsel %vm385, %v422, %v423
    %v425 = vrot.slane %v333, 1
    %v426 = vrot.slane %v334, 1
    %v427 = vsel %vm385, %v425, %v426
    %v428 = vrot.slane %v335, 1
    %v429 = vrot.slane %v336, 1
    %v430 = vsel %vm385, %v428, %v429
    %v431 = vrot.slane %v337, 1
    %v432 = vrot.slane %v338, 1
    %v433 = vsel %vm385, %v431, %v432
    %v450 = vpack.c.bf16 %v391, %v388
    %v451 = vpack.c.bf16 %v397, %v394
    %v452 = vpack.c.bf16 %v403, %v400
    %v453 = vpack.c.bf16 %v409, %v406
    %v454 = vpack.c.bf16 %v415, %v412
    %v455 = vpack.c.bf16 %v421, %v418
    %v456 = vpack.c.bf16 %v427, %v424
    %v457 = vpack.c.bf16 %v433, %v430
    %s458 = scalar_lea.vmem [#allocation6], 8
    %v459 = vld [vmem:[%s458] sm:$0xf]
    %v460 = vld [vmem:[%s458 + $0x4] sm:$0xf]
    %v463 = vunpack.c.l.b16 %v459
    %v464 = vunpack.c.l.b16 %v460
    %v465 = vpack.c.b16 %v464, %v463
    %v468 = vsel %vm155, %v450, 0
    %v471 = vsel %vm155, %v451, 0
    %v474 = vsel %vm155, %v452, 0
    %v477 = vsel %vm155, %v453, 0
    %v480 = vsel %vm155, %v454, 0
    %v483 = vsel %vm155, %v455, 0
    %v486 = vsel %vm155, %v456, 0
    %v489 = vsel %vm155, %v457, 0
    %491 = vmatpush.bf16.msra.mxu0 0
    %492 = vmatpush.bf16.msra.mxu0 0
    %493 = vmatpush.bf16.msra.mxu0 0
    %494 = vmatpush.bf16.msra.mxu0 0
    %495 = vmatpush.bf16.msra.mxu0 0
    %496 = vmatpush.bf16.msra.mxu0 0
    %497 = vmatpush.bf16.msra.mxu0 0
    %498 = vmatpush.bf16.msra.mxu0 %v465
    %499 = vmatmul.bf16.gmra.mxu0 %v468
    %v500 = vpop.f32.mrf.mxu0
    %v501 = vadd.f32 0.0, %v500
    %v502 = vpop.f32.mrf.mxu0
    %v503 = vadd.f32 0.0, %v502
    %504 = vmatmul.bf16.gmra.mxu0 %v471
    %v505 = vpop.f32.mrf.mxu0
    %v506 = vadd.f32 0.0, %v505
    %v507 = vpop.f32.mrf.mxu0
    %v508 = vadd.f32 0.0, %v507
    %509 = vmatmul.bf16.gmra.mxu0 %v474
    %v510 = vpop.f32.mrf.mxu0
    %v511 = vadd.f32 0.0, %v510
    %v512 = vpop.f32.mrf.mxu0
    %v513 = vadd.f32 0.0, %v512
    %514 = vmatmul.bf16.gmra.mxu0 %v477
    %v515 = vpop.f32.mrf.mxu0
    %v516 = vadd.f32 0.0, %v515
    %v517 = vpop.f32.mrf.mxu0
    %v518 = vadd.f32 0.0, %v517
    %519 = vmatmul.bf16.gmra.mxu0 %v480
    %v520 = vpop.f32.mrf.mxu0
    %v521 = vadd.f32 0.0, %v520
    %v522 = vpop.f32.mrf.mxu0
    %v523 = vadd.f32 0.0, %v522
    %524 = vmatmul.bf16.gmra.mxu0 %v483
    %v525 = vpop.f32.mrf.mxu0
    %v526 = vadd.f32 0.0, %v525
    %v527 = vpop.f32.mrf.mxu0
    %v528 = vadd.f32 0.0, %v527
    %529 = vmatmul.bf16.gmra.mxu0 %v486
    %v530 = vpop.f32.mrf.mxu0
    %v531 = vadd.f32 0.0, %v530
    %v532 = vpop.f32.mrf.mxu0
    %v533 = vadd.f32 0.0, %v532
    %534 = vmatmul.bf16.gmra.mxu0 %v489
    %v535 = vpop.f32.mrf.mxu0
    %v536 = vadd.f32 0.0, %v535
    %v537 = vpop.f32.mrf.mxu0
    %v538 = vadd.f32 0.0, %v537
    %539 = vdwg.mxu0
    %v542 = vunpack.c.l.b16 %v351
    %v543 = vunpack.c.l.b16 %v352
    %v544 = vpack.c.b16 %v543, %v542
    %v547 = vsel %vm155, %v343, 0
    %v550 = vsel %vm155, %v344, 0
    %v553 = vsel %vm155, %v345, 0
    %v556 = vsel %vm155, %v346, 0
    %v559 = vsel %vm155, %v347, 0
    %v562 = vsel %vm155, %v348, 0
    %v565 = vsel %vm155, %v349, 0
    %v568 = vsel %vm155, %v350, 0
    %570 = vmatpush.bf16.msra.mxu0 0
    %571 = vmatpush.bf16.msra.mxu0 0
    %572 = vmatpush.bf16.msra.mxu0 0
    %573 = vmatpush.bf16.msra.mxu0 0
    %574 = vmatpush.bf16.msra.mxu0 0
    %575 = vmatpush.bf16.msra.mxu0 0
    %576 = vmatpush.bf16.msra.mxu0 0
    %577 = vmatpush.bf16.msra.mxu0 %v544
    %578 = vmatmul.bf16.gmra.mxu0 %v547
    %v579 = vpop.f32.mrf.mxu0
    %v580 = vadd.f32 %v501, %v579
    %v581 = vpop.f32.mrf.mxu0
    %v582 = vadd.f32 %v503, %v581
    %583 = vmatmul.bf16.gmra.mxu0 %v550
    %v584 = vpop.f32.mrf.mxu0
    %v585 = vadd.f32 %v506, %v584
    %v586 = vpop.f32.mrf.mxu0
    %v587 = vadd.f32 %v508, %v586
    %588 = vmatmul.bf16.gmra.mxu0 %v553
    %v589 = vpop.f32.mrf.mxu0
    %v590 = vadd.f32 %v511, %v589
    %v591 = vpop.f32.mrf.mxu0
    %v592 = vadd.f32 %v513, %v591
    %593 = vmatmul.bf16.gmra.mxu0 %v556
    %v594 = vpop.f32.mrf.mxu0
    %v595 = vadd.f32 %v516, %v594
    %v596 = vpop.f32.mrf.mxu0
    %v597 = vadd.f32 %v518, %v596
    %598 = vmatmul.bf16.gmra.mxu0 %v559
    %v599 = vpop.f32.mrf.mxu0
    %v600 = vadd.f32 %v521, %v599
    %v601 = vpop.f32.mrf.mxu0
    %v602 = vadd.f32 %v523, %v601
    %603 = vmatmul.bf16.gmra.mxu0 %v562
    %v604 = vpop.f32.mrf.mxu0
    %v605 = vadd.f32 %v526, %v604
    %v606 = vpop.f32.mrf.mxu0
    %v607 = vadd.f32 %v528, %v606
    %608 = vmatmul.bf16.gmra.mxu0 %v565
    %v609 = vpop.f32.mrf.mxu0
    %v610 = vadd.f32 %v531, %v609
    %v611 = vpop.f32.mrf.mxu0
    %v612 = vadd.f32 %v533, %v611
    %613 = vmatmul.bf16.gmra.mxu0 %v568
    %v614 = vpop.f32.mrf.mxu0
    %v615 = vadd.f32 %v536, %v614
    %v616 = vpop.f32.mrf.mxu0
    %v617 = vadd.f32 %v538, %v616
    %618 = vdwg.mxu0
    %vm619 = vcmask 1045504
    %v620 = vrot.slane %v303, 2
    %v621 = vrot.slane %v304, 2
    %v622 = vsel %vm619, %v620, %v621
    %v623 = vrot.slane %v305, 2
    %v624 = vrot.slane %v306, 2
    %v625 = vsel %vm619, %v623, %v624
    %v626 = vrot.slane %v307, 2
    %v627 = vrot.slane %v308, 2
    %v628 = vsel %vm619, %v626, %v627
    %v629 = vrot.slane %v309, 2
    %v630 = vrot.slane %v310, 2
    %v631 = vsel %vm619, %v629, %v630
    %v632 = vrot.slane %v311, 2
    %v633 = vrot.slane %v312, 2
    %v634 = vsel %vm619, %v632, %v633
    %v635 = vrot.slane %v313, 2
    %v636 = vrot.slane %v314, 2
    %v637 = vsel %vm619, %v635, %v636
    %v638 = vrot.slane %v315, 2
    %v639 = vrot.slane %v316, 2
    %v640 = vsel %vm619, %v638, %v639
    %v641 = vrot.slane %v317, 2
    %v642 = vrot.slane %v318, 2
    %v643 = vsel %vm619, %v641, %v642
    %v644 = vrot.slane %v323, 2
    %v645 = vrot.slane %v324, 2
    %v646 = vsel %vm619, %v644, %v645
    %v647 = vrot.slane %v325, 2
    %v648 = vrot.slane %v326, 2
    %v649 = vsel %vm619, %v647, %v648
    %v650 = vrot.slane %v327, 2
    %v651 = vrot.slane %v328, 2
    %v652 = vsel %vm619, %v650, %v651
    %v653 = vrot.slane %v329, 2
    %v654 = vrot.slane %v330, 2
    %v655 = vsel %vm619, %v653, %v654
    %v656 = vrot.slane %v331, 2
    %v657 = vrot.slane %v332, 2
    %v658 = vsel %vm619, %v656, %v657
    %v659 = vrot.slane %v333, 2
    %v660 = vrot.slane %v334, 2
    %v661 = vsel %vm619, %v659, %v660
    %v662 = vrot.slane %v335, 2
    %v663 = vrot.slane %v336, 2
    %v664 = vsel %vm619, %v662, %v663
    %v665 = vrot.slane %v337, 2
    %v666 = vrot.slane %v338, 2
    %v667 = vsel %vm619, %v665, %v666
    %v684 = vpack.c.bf16 %v625, %v622
    %v685 = vpack.c.bf16 %v631, %v628
    %v686 = vpack.c.bf16 %v637, %v634
    %v687 = vpack.c.bf16 %v643, %v640
    %v688 = vpack.c.bf16 %v649, %v646
    %v689 = vpack.c.bf16 %v655, %v652
    %v690 = vpack.c.bf16 %v661, %v658
    %v691 = vpack.c.bf16 %v667, %v664
    %s692 = scalar_lea.vmem [#allocation6], 16
    %v693 = vld [vmem:[%s692] sm:$0xf]
    %v694 = vld [vmem:[%s692 + $0x4] sm:$0xf]
    %v697 = vunpack.c.l.b16 %v693
    %v698 = vunpack.c.l.b16 %v694
    %v699 = vpack.c.b16 %v698, %v697
    %v702 = vsel %vm155, %v684, 0
    %v705 = vsel %vm155, %v685, 0
    %v708 = vsel %vm155, %v686, 0
    %v711 = vsel %vm155, %v687, 0
    %v714 = vsel %vm155, %v688, 0
    %v717 = vsel %vm155, %v689, 0
    %v720 = vsel %vm155, %v690, 0
    %v723 = vsel %vm155, %v691, 0
    %725 = vmatpush.bf16.msra.mxu0 0
    %726 = vmatpush.bf16.msra.mxu0 0
    %727 = vmatpush.bf16.msra.mxu0 0
    %728 = vmatpush.bf16.msra.mxu0 0
    %729 = vmatpush.bf16.msra.mxu0 0
    %730 = vmatpush.bf16.msra.mxu0 0
    %731 = vmatpush.bf16.msra.mxu0 0
    %732 = vmatpush.bf16.msra.mxu0 %v699
    %733 = vmatmul.bf16.gmra.mxu0 %v702
    %v734 = vpop.f32.mrf.mxu0
    %v735 = vadd.f32 0.0, %v734
    %v736 = vpop.f32.mrf.mxu0
    %v737 = vadd.f32 0.0, %v736
    %738 = vmatmul.bf16.gmra.mxu0 %v705
    %v739 = vpop.f32.mrf.mxu0
    %v740 = vadd.f32 0.0, %v739
    %v741 = vpop.f32.mrf.mxu0
    %v742 = vadd.f32 0.0, %v741
    %743 = vmatmul.bf16.gmra.mxu0 %v708
    %v744 = vpop.f32.mrf.mxu0
    %v745 = vadd.f32 0.0, %v744
    %v746 = vpop.f32.mrf.mxu0
    %v747 = vadd.f32 0.0, %v746
    %748 = vmatmul.bf16.gmra.mxu0 %v711
    %v749 = vpop.f32.mrf.mxu0
    %v750 = vadd.f32 0.0, %v749
    %v751 = vpop.f32.mrf.mxu0
    %v752 = vadd.f32 0.0, %v751
    %753 = vmatmul.bf16.gmra.mxu0 %v714
    %v754 = vpop.f32.mrf.mxu0
    %v755 = vadd.f32 0.0, %v754
    %v756 = vpop.f32.mrf.mxu0
    %v757 = vadd.f32 0.0, %v756
    %758 = vmatmul.bf16.gmra.mxu0 %v717
    %v759 = vpop.f32.mrf.mxu0
    %v760 = vadd.f32 0.0, %v759
    %v761 = vpop.f32.mrf.mxu0
    %v762 = vadd.f32 0.0, %v761
    %763 = vmatmul.bf16.gmra.mxu0 %v720
    %v764 = vpop.f32.mrf.mxu0
    %v765 = vadd.f32 0.0, %v764
    %v766 = vpop.f32.mrf.mxu0
    %v767 = vadd.f32 0.0, %v766
    %768 = vmatmul.bf16.gmra.mxu0 %v723
    %v769 = vpop.f32.mrf.mxu0
    %v770 = vadd.f32 0.0, %v769
    %v771 = vpop.f32.mrf.mxu0
    %v772 = vadd.f32 0.0, %v771
    %773 = vdwg.mxu0
    %v774 = vadd.f32 %v580, %v735
    %v775 = vadd.f32 %v582, %v737
    %v776 = vadd.f32 %v585, %v740
    %v777 = vadd.f32 %v587, %v742
    %v778 = vadd.f32 %v590, %v745
    %v779 = vadd.f32 %v592, %v747
    %v780 = vadd.f32 %v595, %v750
    %v781 = vadd.f32 %v597, %v752
    %v782 = vadd.f32 %v600, %v755
    %v783 = vadd.f32 %v602, %v757
    %v784 = vadd.f32 %v605, %v760
    %v785 = vadd.f32 %v607, %v762
    %v786 = vadd.f32 %v610, %v765
    %v787 = vadd.f32 %v612, %v767
    %v788 = vadd.f32 %v615, %v770
    %v789 = vadd.f32 %v617, %v772
    %v790 = vpack.c.bf16 %v307, %v305
    %v791 = vpack.c.bf16 %v311, %v309
    %v792 = vpack.c.bf16 %v315, %v313
    %v793 = vpack.c.bf16 %v319, %v317
    %v794 = vpack.c.bf16 %v327, %v325
    %v795 = vpack.c.bf16 %v331, %v329
    %v796 = vpack.c.bf16 %v335, %v333
    %v797 = vpack.c.bf16 %v339, %v337
    %s798 = scalar_lea.vmem [#allocation6], 24
    %v799 = vld [vmem:[%s798] sm:$0xf]
    %v800 = vld [vmem:[%s798 + $0x4] sm:$0xf]
    %v803 = vunpack.c.l.b16 %v799
    %v804 = vunpack.c.l.b16 %v800
    %v805 = vpack.c.b16 %v804, %v803
    %v808 = vsel %vm155, %v790, 0
    %v811 = vsel %vm155, %v791, 0
    %v814 = vsel %vm155, %v792, 0
    %v817 = vsel %vm155, %v793, 0
    %v820 = vsel %vm155, %v794, 0
    %v823 = vsel %vm155, %v795, 0
    %v826 = vsel %vm155, %v796, 0
    %v829 = vsel %vm155, %v797, 0
    %831 = vmatpush.bf16.msra.mxu0 0
    %832 = vmatpush.bf16.msra.mxu0 0
    %833 = vmatpush.bf16.msra.mxu0 0
    %834 = vmatpush.bf16.msra.mxu0 0
    %835 = vmatpush.bf16.msra.mxu0 0
    %836 = vmatpush.bf16.msra.mxu0 0
    %837 = vmatpush.bf16.msra.mxu0 0
    %838 = vmatpush.bf16.msra.mxu0 %v805
    %839 = vmatmul.bf16.gmra.mxu0 %v808
    %v840 = vpop.f32.mrf.mxu0
    %v841 = vadd.f32 0.0, %v840
    %v842 = vpop.f32.mrf.mxu0
    %v843 = vadd.f32 0.0, %v842
    %844 = vmatmul.bf16.gmra.mxu0 %v811
    %v845 = vpop.f32.mrf.mxu0
    %v846 = vadd.f32 0.0, %v845
    %v847 = vpop.f32.mrf.mxu0
    %v848 = vadd.f32 0.0, %v847
    %849 = vmatmul.bf16.gmra.mxu0 %v814
    %v850 = vpop.f32.mrf.mxu0
    %v851 = vadd.f32 0.0, %v850
    %v852 = vpop.f32.mrf.mxu0
    %v853 = vadd.f32 0.0, %v852
    %854 = vmatmul.bf16.gmra.mxu0 %v817
    %v855 = vpop.f32.mrf.mxu0
    %v856 = vadd.f32 0.0, %v855
    %v857 = vpop.f32.mrf.mxu0
    %v858 = vadd.f32 0.0, %v857
    %859 = vmatmul.bf16.gmra.mxu0 %v820
    %v860 = vpop.f32.mrf.mxu0
    %v861 = vadd.f32 0.0, %v860
    %v862 = vpop.f32.mrf.mxu0
    %v863 = vadd.f32 0.0, %v862
    %864 = vmatmul.bf16.gmra.mxu0 %v823
    %v865 = vpop.f32.mrf.mxu0
    %v866 = vadd.f32 0.0, %v865
    %v867 = vpop.f32.mrf.mxu0
    %v868 = vadd.f32 0.0, %v867
    %869 = vmatmul.bf16.gmra.mxu0 %v826
    %v870 = vpop.f32.mrf.mxu0
    %v871 = vadd.f32 0.0, %v870
    %v872 = vpop.f32.mrf.mxu0
    %v873 = vadd.f32 0.0, %v872
    %874 = vmatmul.bf16.gmra.mxu0 %v829
    %v875 = vpop.f32.mrf.mxu0
    %v876 = vadd.f32 0.0, %v875
    %v877 = vpop.f32.mrf.mxu0
    %v878 = vadd.f32 0.0, %v877
    %879 = vdwg.mxu0
    %v880 = vadd.f32 %v774, %v841
    %v881 = vadd.f32 %v775, %v843
    %v882 = vadd.f32 %v776, %v846
    %v883 = vadd.f32 %v777, %v848
    %v884 = vadd.f32 %v778, %v851
    %v885 = vadd.f32 %v779, %v853
    %v886 = vadd.f32 %v780, %v856
    %v887 = vadd.f32 %v781, %v858
    %v888 = vadd.f32 %v782, %v861
    %v889 = vadd.f32 %v783, %v863
    %v890 = vadd.f32 %v784, %v866
    %v891 = vadd.f32 %v785, %v868
    %v892 = vadd.f32 %v786, %v871
    %v893 = vadd.f32 %v787, %v873
    %v894 = vadd.f32 %v788, %v876
    %v895 = vadd.f32 %v789, %v878
    %v900 = vrot.slane %v319, 1
    %v901 = vrot.slane %v320, 1
    %v902 = vsel %vm385, %v900, %v901
    %v903 = vrot.slane %v339, 1
    %v904 = vrot.slane %v340, 1
    %v905 = vsel %vm385, %v903, %v904
    %v908 = vpack.c.bf16 %v394, %v391
    %v909 = vpack.c.bf16 %v400, %v397
    %v910 = vpack.c.bf16 %v406, %v403
    %v911 = vpack.c.bf16 %v902, %v409
    %v912 = vpack.c.bf16 %v418, %v415
    %v913 = vpack.c.bf16 %v424, %v421
    %v914 = vpack.c.bf16 %v430, %v427
    %v915 = vpack.c.bf16 %v905, %v433
    %s916 = scalar_lea.vmem [#allocation6], 32
    %v917 = vld [vmem:[%s916] sm:$0xf]
    %v918 = vld [vmem:[%s916 + $0x4] sm:$0xf]
    %v921 = vunpack.c.l.b16 %v917
    %v922 = vunpack.c.l.b16 %v918
    %v923 = vpack.c.b16 %v922, %v921
    %v926 = vsel %vm155, %v908, 0
    %v929 = vsel %vm155, %v909, 0
    %v932 = vsel %vm155, %v910, 0
    %v935 = vsel %vm155, %v911, 0
    %v938 = vsel %vm155, %v912, 0
    %v941 = vsel %vm155, %v913, 0
    %v944 = vsel %vm155, %v914, 0
    %v947 = vsel %vm155, %v915, 0
    %949 = vmatpush.bf16.msra.mxu0 0
    %950 = vmatpush.bf16.msra.mxu0 0
    %951 = vmatpush.bf16.msra.mxu0 0
    %952 = vmatpush.bf16.msra.mxu0 0
    %953 = vmatpush.bf16.msra.mxu0 0
    %954 = vmatpush.bf16.msra.mxu0 0
    %955 = vmatpush.bf16.msra.mxu0 0
    %956 = vmatpush.bf16.msra.mxu0 %v923
    %957 = vmatmul.bf16.gmra.mxu0 %v926
    %v958 = vpop.f32.mrf.mxu0
    %v959 = vadd.f32 0.0, %v958
    %v960 = vpop.f32.mrf.mxu0
    %v961 = vadd.f32 0.0, %v960
    %962 = vmatmul.bf16.gmra.mxu0 %v929
    %v963 = vpop.f32.mrf.mxu0
    %v964 = vadd.f32 0.0, %v963
    %v965 = vpop.f32.mrf.mxu0
    %v966 = vadd.f32 0.0, %v965
    %967 = vmatmul.bf16.gmra.mxu0 %v932
    %v968 = vpop.f32.mrf.mxu0
    %v969 = vadd.f32 0.0, %v968
    %v970 = vpop.f32.mrf.mxu0
    %v971 = vadd.f32 0.0, %v970
    %972 = vmatmul.bf16.gmra.mxu0 %v935
    %v973 = vpop.f32.mrf.mxu0
    %v974 = vadd.f32 0.0, %v973
    %v975 = vpop.f32.mrf.mxu0
    %v976 = vadd.f32 0.0, %v975
    %977 = vmatmul.bf16.gmra.mxu0 %v938
    %v978 = vpop.f32.mrf.mxu0
    %v979 = vadd.f32 0.0, %v978
    %v980 = vpop.f32.mrf.mxu0
    %v981 = vadd.f32 0.0, %v980
    %982 = vmatmul.bf16.gmra.mxu0 %v941
    %v983 = vpop.f32.mrf.mxu0
    %v984 = vadd.f32 0.0, %v983
    %v985 = vpop.f32.mrf.mxu0
    %v986 = vadd.f32 0.0, %v985
    %987 = vmatmul.bf16.gmra.mxu0 %v944
    %v988 = vpop.f32.mrf.mxu0
    %v989 = vadd.f32 0.0, %v988
    %v990 = vpop.f32.mrf.mxu0
    %v991 = vadd.f32 0.0, %v990
    %992 = vmatmul.bf16.gmra.mxu0 %v947
    %v993 = vpop.f32.mrf.mxu0
    %v994 = vadd.f32 0.0, %v993
    %v995 = vpop.f32.mrf.mxu0
    %v996 = vadd.f32 0.0, %v995
    %997 = vdwg.mxu0
    %v998 = vadd.f32 %v880, %v959
    %v999 = vadd.f32 %v881, %v961
    %v1000 = vadd.f32 %v882, %v964
    %v1001 = vadd.f32 %v883, %v966
    %v1002 = vadd.f32 %v884, %v969
    %v1003 = vadd.f32 %v885, %v971
    %v1004 = vadd.f32 %v886, %v974
    %v1005 = vadd.f32 %v887, %v976
    %v1006 = vadd.f32 %v888, %v979
    %v1007 = vadd.f32 %v889, %v981
    %v1008 = vadd.f32 %v890, %v984
    %v1009 = vadd.f32 %v891, %v986
    %v1010 = vadd.f32 %v892, %v989
    %v1011 = vadd.f32 %v893, %v991
    %v1012 = vadd.f32 %v894, %v994
    %v1013 = vadd.f32 %v895, %v996
    %v1014 = vrot.slane %v319, 2
    %v1015 = vrot.slane %v320, 2
    %v1016 = vsel %vm619, %v1014, %v1015
    %v1017 = vrot.slane %v339, 2
    %v1018 = vrot.slane %v340, 2
    %v1019 = vsel %vm619, %v1017, %v1018
    %v1022 = vpack.c.bf16 %v628, %v625
    %v1023 = vpack.c.bf16 %v634, %v631
    %v1024 = vpack.c.bf16 %v640, %v637
    %v1025 = vpack.c.bf16 %v1016, %v643
    %v1026 = vpack.c.bf16 %v652, %v649
    %v1027 = vpack.c.bf16 %v658, %v655
    %v1028 = vpack.c.bf16 %v664, %v661
    %v1029 = vpack.c.bf16 %v1019, %v667
    %s1030 = scalar_lea.vmem [#allocation6], 40
    %v1031 = vld [vmem:[%s1030] sm:$0xf]
    %v1032 = vld [vmem:[%s1030 + $0x4] sm:$0xf]
    %v1035 = vunpack.c.l.b16 %v1031
    %v1036 = vunpack.c.l.b16 %v1032
    %v1037 = vpack.c.b16 %v1036, %v1035
    %v1040 = vsel %vm155, %v1022, 0
    %v1043 = vsel %vm155, %v1023, 0
    %v1046 = vsel %vm155, %v1024, 0
    %v1049 = vsel %vm155, %v1025, 0
    %v1052 = vsel %vm155, %v1026, 0
    %v1055 = vsel %vm155, %v1027, 0
    %v1058 = vsel %vm155, %v1028, 0
    %v1061 = vsel %vm155, %v1029, 0
    %1063 = vmatpush.bf16.msra.mxu0 0
    %1064 = vmatpush.bf16.msra.mxu0 0
    %1065 = vmatpush.bf16.msra.mxu0 0
    %1066 = vmatpush.bf16.msra.mxu0 0
    %1067 = vmatpush.bf16.msra.mxu0 0
    %1068 = vmatpush.bf16.msra.mxu0 0
    %1069 = vmatpush.bf16.msra.mxu0 0
    %1070 = vmatpush.bf16.msra.mxu0 %v1037
    %1071 = vmatmul.bf16.gmra.mxu0 %v1040
    %v1072 = vpop.f32.mrf.mxu0
    %v1073 = vadd.f32 0.0, %v1072
    %v1074 = vpop.f32.mrf.mxu0
    %v1075 = vadd.f32 0.0, %v1074
    %1076 = vmatmul.bf16.gmra.mxu0 %v1043
    %v1077 = vpop.f32.mrf.mxu0
    %v1078 = vadd.f32 0.0, %v1077
    %v1079 = vpop.f32.mrf.mxu0
    %v1080 = vadd.f32 0.0, %v1079
    %1081 = vmatmul.bf16.gmra.mxu0 %v1046
    %v1082 = vpop.f32.mrf.mxu0
    %v1083 = vadd.f32 0.0, %v1082
    %v1084 = vpop.f32.mrf.mxu0
    %v1085 = vadd.f32 0.0, %v1084
    %1086 = vmatmul.bf16.gmra.mxu0 %v1049
    %v1087 = vpop.f32.mrf.mxu0
    %v1088 = vadd.f32 0.0, %v1087
    %v1089 = vpop.f32.mrf.mxu0
    %v1090 = vadd.f32 0.0, %v1089
    %1091 = vmatmul.bf16.gmra.mxu0 %v1052
    %v1092 = vpop.f32.mrf.mxu0
    %v1093 = vadd.f32 0.0, %v1092
    %v1094 = vpop.f32.mrf.mxu0
    %v1095 = vadd.f32 0.0, %v1094
    %1096 = vmatmul.bf16.gmra.mxu0 %v1055
    %v1097 = vpop.f32.mrf.mxu0
    %v1098 = vadd.f32 0.0, %v1097
    %v1099 = vpop.f32.mrf.mxu0
    %v1100 = vadd.f32 0.0, %v1099
    %1101 = vmatmul.bf16.gmra.mxu0 %v1058
    %v1102 = vpop.f32.mrf.mxu0
    %v1103 = vadd.f32 0.0, %v1102
    %v1104 = vpop.f32.mrf.mxu0
    %v1105 = vadd.f32 0.0, %v1104
    %1106 = vmatmul.bf16.gmra.mxu0 %v1061
    %v1107 = vpop.f32.mrf.mxu0
    %v1108 = vadd.f32 0.0, %v1107
    %v1109 = vpop.f32.mrf.mxu0
    %v1110 = vadd.f32 0.0, %v1109
    %1111 = vdwg.mxu0
    %v1112 = vadd.f32 %v998, %v1073
    %v1113 = vadd.f32 %v999, %v1075
    %v1114 = vadd.f32 %v1000, %v1078
    %v1115 = vadd.f32 %v1001, %v1080
    %v1116 = vadd.f32 %v1002, %v1083
    %v1117 = vadd.f32 %v1003, %v1085
    %v1118 = vadd.f32 %v1004, %v1088
    %v1119 = vadd.f32 %v1005, %v1090
    %v1120 = vadd.f32 %v1006, %v1093
    %v1121 = vadd.f32 %v1007, %v1095
    %v1122 = vadd.f32 %v1008, %v1098
    %v1123 = vadd.f32 %v1009, %v1100
    %v1124 = vadd.f32 %v1010, %v1103
    %v1125 = vadd.f32 %v1011, %v1105
    %v1126 = vadd.f32 %v1012, %v1108
    %v1127 = vadd.f32 %v1013, %v1110
    %v1128 = vpack.c.bf16 %v321, %v319
    %v1129 = vpack.c.bf16 %v341, %v339
    %s1130 = scalar_lea.vmem [#allocation6], 48
    %v1131 = vld [vmem:[%s1130] sm:$0xf]
    %v1132 = vld [vmem:[%s1130 + $0x4] sm:$0xf]
    %v1135 = vunpack.c.l.b16 %v1131
    %v1136 = vunpack.c.l.b16 %v1132
    %v1137 = vpack.c.b16 %v1136, %v1135
    %v1140 = vsel %vm155, %v1128, 0
    %v1143 = vsel %vm155, %v1129, 0
    %1145 = vmatpush.bf16.msra.mxu0 0
    %1146 = vmatpush.bf16.msra.mxu0 0
    %1147 = vmatpush.bf16.msra.mxu0 0
    %1148 = vmatpush.bf16.msra.mxu0 0
    %1149 = vmatpush.bf16.msra.mxu0 0
    %1150 = vmatpush.bf16.msra.mxu0 0
    %1151 = vmatpush.bf16.msra.mxu0 0
    %1152 = vmatpush.bf16.msra.mxu0 %v1137
    %1153 = vmatmul.bf16.gmra.mxu0 %v550
    %v1154 = vpop.f32.mrf.mxu0
    %v1155 = vadd.f32 0.0, %v1154
    %v1156 = vpop.f32.mrf.mxu0
    %v1157 = vadd.f32 0.0, %v1156
    %1158 = vmatmul.bf16.gmra.mxu0 %v553
    %v1159 = vpop.f32.mrf.mxu0
    %v1160 = vadd.f32 0.0, %v1159
    %v1161 = vpop.f32.mrf.mxu0
    %v1162 = vadd.f32 0.0, %v1161
    %1163 = vmatmul.bf16.gmra.mxu0 %v556
    %v1164 = vpop.f32.mrf.mxu0
    %v1165 = vadd.f32 0.0, %v1164
    %v1166 = vpop.f32.mrf.mxu0
    %v1167 = vadd.f32 0.0, %v1166
    %1168 = vmatmul.bf16.gmra.mxu0 %v1140
    %v1169 = vpop.f32.mrf.mxu0
    %v1170 = vadd.f32 0.0, %v1169
    %v1171 = vpop.f32.mrf.mxu0
    %v1172 = vadd.f32 0.0, %v1171
    %1173 = vmatmul.bf16.gmra.mxu0 %v562
    %v1174 = vpop.f32.mrf.mxu0
    %v1175 = vadd.f32 0.0, %v1174
    %v1176 = vpop.f32.mrf.mxu0
    %v1177 = vadd.f32 0.0, %v1176
    %1178 = vmatmul.bf16.gmra.mxu0 %v565
    %v1179 = vpop.f32.mrf.mxu0
    %v1180 = vadd.f32 0.0, %v1179
    %v1181 = vpop.f32.mrf.mxu0
    %v1182 = vadd.f32 0.0, %v1181
    %1183 = vmatmul.bf16.gmra.mxu0 %v568
    %v1184 = vpop.f32.mrf.mxu0
    %v1185 = vadd.f32 0.0, %v1184
    %v1186 = vpop.f32.mrf.mxu0
    %v1187 = vadd.f32 0.0, %v1186
    %1188 = vmatmul.bf16.gmra.mxu0 %v1143
    %v1189 = vpop.f32.mrf.mxu0
    %v1190 = vadd.f32 0.0, %v1189
    %v1191 = vpop.f32.mrf.mxu0
    %v1192 = vadd.f32 0.0, %v1191
    %1193 = vdwg.mxu0
    %v1194 = vadd.f32 %v1112, %v1155
    %v1195 = vadd.f32 %v1113, %v1157
    %v1196 = vadd.f32 %v1114, %v1160
    %v1197 = vadd.f32 %v1115, %v1162
    %v1198 = vadd.f32 %v1116, %v1165
    %v1199 = vadd.f32 %v1117, %v1167
    %v1200 = vadd.f32 %v1118, %v1170
    %v1201 = vadd.f32 %v1119, %v1172
    %v1202 = vadd.f32 %v1120, %v1175
    %v1203 = vadd.f32 %v1121, %v1177
    %v1204 = vadd.f32 %v1122, %v1180
    %v1205 = vadd.f32 %v1123, %v1182
    %v1206 = vadd.f32 %v1124, %v1185
    %v1207 = vadd.f32 %v1125, %v1187
    %v1208 = vadd.f32 %v1126, %v1190
    %v1209 = vadd.f32 %v1127, %v1192
    %v1214 = vrot.slane %v321, 1
    %v1215 = vrot.slane %v322, 1
    %v1216 = vsel %vm385, %v1214, %v1215
    %v1217 = vrot.slane %v341, 1
    %v1218 = vrot.slane %v342, 1
    %v1219 = vsel %vm385, %v1217, %v1218
    %v1222 = vpack.c.bf16 %v1216, %v902
    %v1223 = vpack.c.bf16 %v1219, %v905
    %s1224 = scalar_lea.vmem [#allocation6], 56
    %v1225 = vld [vmem:[%s1224] sm:$0xf]
    %v1226 = vld [vmem:[%s1224 + $0x4] sm:$0xf]
    %v1229 = vunpack.c.l.b16 %v1225
    %v1230 = vunpack.c.l.b16 %v1226
    %v1231 = vpack.c.b16 %v1230, %v1229
    %v1234 = vsel %vm155, %v1222, 0
    %v1237 = vsel %vm155, %v1223, 0
    %1239 = vmatpush.bf16.msra.mxu0 0
    %1240 = vmatpush.bf16.msra.mxu0 0
    %1241 = vmatpush.bf16.msra.mxu0 0
    %1242 = vmatpush.bf16.msra.mxu0 0
    %1243 = vmatpush.bf16.msra.mxu0 0
    %1244 = vmatpush.bf16.msra.mxu0 0
    %1245 = vmatpush.bf16.msra.mxu0 0
    %1246 = vmatpush.bf16.msra.mxu0 %v1231
    %1247 = vmatmul.bf16.gmra.mxu0 %v471
    %v1248 = vpop.f32.mrf.mxu0
    %v1249 = vadd.f32 0.0, %v1248
    %v1250 = vpop.f32.mrf.mxu0
    %v1251 = vadd.f32 0.0, %v1250
    %1252 = vmatmul.bf16.gmra.mxu0 %v474
    %v1253 = vpop.f32.mrf.mxu0
    %v1254 = vadd.f32 0.0, %v1253
    %v1255 = vpop.f32.mrf.mxu0
    %v1256 = vadd.f32 0.0, %v1255
    %1257 = vmatmul.bf16.gmra.mxu0 %v477
    %v1258 = vpop.f32.mrf.mxu0
    %v1259 = vadd.f32 0.0, %v1258
    %v1260 = vpop.f32.mrf.mxu0
    %v1261 = vadd.f32 0.0, %v1260
    %1262 = vmatmul.bf16.gmra.mxu0 %v1234
    %v1263 = vpop.f32.mrf.mxu0
    %v1264 = vadd.f32 0.0, %v1263
    %v1265 = vpop.f32.mrf.mxu0
    %v1266 = vadd.f32 0.0, %v1265
    %1267 = vmatmul.bf16.gmra.mxu0 %v483
    %v1268 = vpop.f32.mrf.mxu0
    %v1269 = vadd.f32 0.0, %v1268
    %v1270 = vpop.f32.mrf.mxu0
    %v1271 = vadd.f32 0.0, %v1270
    %1272 = vmatmul.bf16.gmra.mxu0 %v486
    %v1273 = vpop.f32.mrf.mxu0
    %v1274 = vadd.f32 0.0, %v1273
    %v1275 = vpop.f32.mrf.mxu0
    %v1276 = vadd.f32 0.0, %v1275
    %1277 = vmatmul.bf16.gmra.mxu0 %v489
    %v1278 = vpop.f32.mrf.mxu0
    %v1279 = vadd.f32 0.0, %v1278
    %v1280 = vpop.f32.mrf.mxu0
    %v1281 = vadd.f32 0.0, %v1280
    %1282 = vmatmul.bf16.gmra.mxu0 %v1237
    %v1283 = vpop.f32.mrf.mxu0
    %v1284 = vadd.f32 0.0, %v1283
    %v1285 = vpop.f32.mrf.mxu0
    %v1286 = vadd.f32 0.0, %v1285
    %1287 = vdwg.mxu0
    %v1288 = vadd.f32 %v1194, %v1249
    %v1289 = vadd.f32 %v1195, %v1251
    %v1290 = vadd.f32 %v1196, %v1254
    %v1291 = vadd.f32 %v1197, %v1256
    %v1292 = vadd.f32 %v1198, %v1259
    %v1293 = vadd.f32 %v1199, %v1261
    %v1294 = vadd.f32 %v1200, %v1264
    %v1295 = vadd.f32 %v1201, %v1266
    %v1296 = vadd.f32 %v1202, %v1269
    %v1297 = vadd.f32 %v1203, %v1271
    %v1298 = vadd.f32 %v1204, %v1274
    %v1299 = vadd.f32 %v1205, %v1276
    %v1300 = vadd.f32 %v1206, %v1279
    %v1301 = vadd.f32 %v1207, %v1281
    %v1302 = vadd.f32 %v1208, %v1284
    %v1303 = vadd.f32 %v1209, %v1286
    %v1304 = vrot.slane %v321, 2
    %v1305 = vrot.slane %v322, 2
    %v1306 = vsel %vm619, %v1304, %v1305
    %v1307 = vrot.slane %v341, 2
    %v1308 = vrot.slane %v342, 2
    %v1309 = vsel %vm619, %v1307, %v1308
    %v1312 = vpack.c.bf16 %v1306, %v1016
    %v1313 = vpack.c.bf16 %v1309, %v1019
    %s1314 = scalar_lea.vmem [#allocation6], 64
    %v1315 = vld [vmem:[%s1314] sm:$0xf]
    %v1316 = vld [vmem:[%s1314 + $0x4] sm:$0xf]
    %v1319 = vunpack.c.l.b16 %v1315
    %v1320 = vunpack.c.l.b16 %v1316
    %v1321 = vpack.c.b16 %v1320, %v1319
    %v1324 = vsel %vm155, %v1312, 0
    %v1327 = vsel %vm155, %v1313, 0
    %1329 = vmatpush.bf16.msra.mxu0 0
    %1330 = vmatpush.bf16.msra.mxu0 0
    %1331 = vmatpush.bf16.msra.mxu0 0
    %1332 = vmatpush.bf16.msra.mxu0 0
    %1333 = vmatpush.bf16.msra.mxu0 0
    %1334 = vmatpush.bf16.msra.mxu0 0
    %1335 = vmatpush.bf16.msra.mxu0 0
    %1336 = vmatpush.bf16.msra.mxu0 %v1321
    %1337 = vmatmul.bf16.gmra.mxu0 %v705
    %v1338 = vpop.f32.mrf.mxu0
    %v1339 = vadd.f32 0.0, %v1338
    %v1340 = vpop.f32.mrf.mxu0
    %v1341 = vadd.f32 0.0, %v1340
    %1342 = vmatmul.bf16.gmra.mxu0 %v708
    %v1343 = vpop.f32.mrf.mxu0
    %v1344 = vadd.f32 0.0, %v1343
    %v1345 = vpop.f32.mrf.mxu0
    %v1346 = vadd.f32 0.0, %v1345
    %1347 = vmatmul.bf16.gmra.mxu0 %v711
    %v1348 = vpop.f32.mrf.mxu0
    %v1349 = vadd.f32 0.0, %v1348
    %v1350 = vpop.f32.mrf.mxu0
    %v1351 = vadd.f32 0.0, %v1350
    %1352 = vmatmul.bf16.gmra.mxu0 %v1324
    %v1353 = vpop.f32.mrf.mxu0
    %v1354 = vadd.f32 0.0, %v1353
    %v1355 = vpop.f32.mrf.mxu0
    %v1356 = vadd.f32 0.0, %v1355
    %1357 = vmatmul.bf16.gmra.mxu0 %v717
    %v1358 = vpop.f32.mrf.mxu0
    %v1359 = vadd.f32 0.0, %v1358
    %v1360 = vpop.f32.mrf.mxu0
    %v1361 = vadd.f32 0.0, %v1360
    %1362 = vmatmul.bf16.gmra.mxu0 %v720
    %v1363 = vpop.f32.mrf.mxu0
    %v1364 = vadd.f32 0.0, %v1363
    %v1365 = vpop.f32.mrf.mxu0
    %v1366 = vadd.f32 0.0, %v1365
    %1367 = vmatmul.bf16.gmra.mxu0 %v723
    %v1368 = vpop.f32.mrf.mxu0
    %v1369 = vadd.f32 0.0, %v1368
    %v1370 = vpop.f32.mrf.mxu0
    %v1371 = vadd.f32 0.0, %v1370
    %1372 = vmatmul.bf16.gmra.mxu0 %v1327
    %v1373 = vpop.f32.mrf.mxu0
    %v1374 = vadd.f32 0.0, %v1373
    %v1375 = vpop.f32.mrf.mxu0
    %v1376 = vadd.f32 0.0, %v1375
    %1377 = vdwg.mxu0
    %v1378 = vadd.f32 %v1288, %v1339
    %v1379 = vadd.f32 %v1289, %v1341
    %v1380 = vadd.f32 %v1290, %v1344
    %v1381 = vadd.f32 %v1291, %v1346
    %v1382 = vadd.f32 %v1292, %v1349
    %v1383 = vadd.f32 %v1293, %v1351
    %v1384 = vadd.f32 %v1294, %v1354
    %v1385 = vadd.f32 %v1295, %v1356
    %v1386 = vadd.f32 %v1296, %v1359
    %v1387 = vadd.f32 %v1297, %v1361
    %v1388 = vadd.f32 %v1298, %v1364
    %v1389 = vadd.f32 %v1299, %v1366
    %v1390 = vadd.f32 %v1300, %v1369
    %v1391 = vadd.f32 %v1301, %v1371
    %v1392 = vadd.f32 %v1302, %v1374
    %v1393 = vadd.f32 %v1303, %v1376
    %v1394 = vld [vmem:[%s3] sm:$0x1]
    %v1396 = vperm.slane %v1394, 0
    %v1398 = vmul.f32 %v1378, %v1396
    %v1399 = vmul.f32 %v1379, %v1396
    %v1400 = vmul.f32 %v1380, %v1396
    %v1401 = vmul.f32 %v1381, %v1396
    %v1402 = vmul.f32 %v1382, %v1396
    %v1403 = vmul.f32 %v1383, %v1396
    %v1404 = vmul.f32 %v1384, %v1396
    %v1405 = vmul.f32 %v1385, %v1396
    %v1406 = vmul.f32 %v1386, %v1396
    %v1407 = vmul.f32 %v1387, %v1396
    %v1408 = vmul.f32 %v1388, %v1396
    %v1409 = vmul.f32 %v1389, %v1396
    %v1410 = vmul.f32 %v1390, %v1396
    %v1411 = vmul.f32 %v1391, %v1396
    %v1412 = vmul.f32 %v1392, %v1396
    %v1413 = vmul.f32 %v1393, %v1396
    %v1414 = vld [vmem:[%s4] sm:$0x1]
    %v1416 = vperm.slane %v1414, 0
    %v1418 = vadd.f32 %v1398, %v1416
    %v1419 = vadd.f32 %v1399, %v1416
    %v1420 = vadd.f32 %v1400, %v1416
    %v1421 = vadd.f32 %v1401, %v1416
    %v1422 = vadd.f32 %v1402, %v1416
    %v1423 = vadd.f32 %v1403, %v1416
    %v1424 = vadd.f32 %v1404, %v1416
    %v1425 = vadd.f32 %v1405, %v1416
    %v1426 = vadd.f32 %v1406, %v1416
    %v1427 = vadd.f32 %v1407, %v1416
    %v1428 = vadd.f32 %v1408, %v1416
    %v1429 = vadd.f32 %v1409, %v1416
    %v1430 = vadd.f32 %v1410, %v1416
    %v1431 = vadd.f32 %v1411, %v1416
    %v1432 = vadd.f32 %v1412, %v1416
    %v1433 = vadd.f32 %v1413, %v1416
    %v1434 = vmax.f32 %v1418, 0.0
    %v1435 = vmax.f32 %v1419, 0.0
    %v1436 = vmax.f32 %v1420, 0.0
    %v1437 = vmax.f32 %v1421, 0.0
    %v1438 = vmax.f32 %v1422, 0.0
    %v1439 = vmax.f32 %v1423, 0.0
    %v1440 = vmax.f32 %v1424, 0.0
    %v1441 = vmax.f32 %v1425, 0.0
    %v1442 = vmax.f32 %v1426, 0.0
    %v1443 = vmax.f32 %v1427, 0.0
    %v1444 = vmax.f32 %v1428, 0.0
    %v1445 = vmax.f32 %v1429, 0.0
    %v1446 = vmax.f32 %v1430, 0.0
    %v1447 = vmax.f32 %v1431, 0.0
    %v1448 = vmax.f32 %v1432, 0.0
    %v1449 = vmax.f32 %v1433, 0.0
    %vm1450 = vcmask 261120
    %1451 = vst.msk [vmem:[#allocation3] sm:$0xff] %vm1450, 0.0
    %vm1452 = vcmask 254976
    %1453 = vst.msk [vmem:[#allocation3 + $0x8] sm:$0x3] %vm1452, 0.0
    %1454 = vst.msk [vmem:[#allocation3 + $0x10] sm:$0xff] %vm1450, 0.0
    %1455 = vst.msk [vmem:[#allocation3 + $0x18] sm:$0x3] %vm1452, 0.0
    %1456 = vst.msk [vmem:[#allocation3 + $0x20] sm:$0xff] %vm1450, 0.0
    %1457 = vst.msk [vmem:[#allocation3 + $0x28] sm:$0x3] %vm1452, 0.0
    %1458 = vst.msk [vmem:[#allocation3 + $0x30] sm:$0xff] %vm1450, 0.0
    %1459 = vst.msk [vmem:[#allocation3 + $0x38] sm:$0x3] %vm1452, 0.0
    %1460 = vst.msk [vmem:[#allocation3 + $0x40] sm:$0xff] %vm1450, 0.0
    %1461 = vst.msk [vmem:[#allocation3 + $0x48] sm:$0x3] %vm1452, 0.0
    %1462 = vst.msk [vmem:[#allocation3 + $0x50] sm:$0xff] %vm1450, 0.0
    %1463 = vst.msk [vmem:[#allocation3 + $0x58] sm:$0x3] %vm1452, 0.0
    %1464 = vst.msk [vmem:[#allocation3 + $0x60] sm:$0xff] %vm1450, 0.0
    %1465 = vst.msk [vmem:[#allocation3 + $0x68] sm:$0x3] %vm1452, 0.0
    %1466 = vst.msk [vmem:[#allocation3 + $0x70] sm:$0xff] %vm1450, 0.0
    %1467 = vst.msk [vmem:[#allocation3 + $0x78] sm:$0x3] %vm1452, 0.0
    %1468 = vst.msk [vmem:[#allocation3 + $0x80] sm:$0xff] %vm1450, 0.0
    %1469 = vst.msk [vmem:[#allocation3 + $0x88] sm:$0x3] %vm1452, 0.0
    %1470 = vst.msk [vmem:[#allocation3 + $0x90] sm:$0xff] %vm1450, 0.0
    %1471 = vst.msk [vmem:[#allocation3 + $0x98] sm:$0x3] %vm1452, 0.0
    %1472 = vst.msk [vmem:[#allocation3 + $0xa0] sm:$0xff] %vm1450, 0.0
    %1473 = vst.msk [vmem:[#allocation3 + $0xa8] sm:$0x3] %vm1452, 0.0
    %1474 = vst.msk [vmem:[#allocation3 + $0xb0] sm:$0xff] %vm1450, 0.0
    %1475 = vst.msk [vmem:[#allocation3 + $0xb8] sm:$0x3] %vm1452, 0.0
    %1476 = vst.msk [vmem:[#allocation3 + $0xc0] sm:$0xff] %vm1450, 0.0
    %1477 = vst.msk [vmem:[#allocation3 + $0xc8] sm:$0x3] %vm1452, 0.0
    %1478 = vst.msk [vmem:[#allocation3 + $0xd0] sm:$0xff] %vm1450, 0.0
    %1479 = vst.msk [vmem:[#allocation3 + $0xd8] sm:$0x3] %vm1452, 0.0
    %1480 = vst.msk [vmem:[#allocation3 + $0xe0] sm:$0xff] %vm1450, 0.0
    %1481 = vst.msk [vmem:[#allocation3 + $0xe8] sm:$0x3] %vm1452, 0.0
    %1482 = vst.msk [vmem:[#allocation3 + $0xf0] sm:$0xff] %vm1450, 0.0
    %1483 = vst.msk [vmem:[#allocation3 + $0xf8] sm:$0x3] %vm1452, 0.0
    %1484 = vst.msk [vmem:[#allocation3 + $0x100] sm:$0xff] %vm1450, 0.0
    %1485 = vst.msk [vmem:[#allocation3 + $0x108] sm:$0x3] %vm1452, 0.0
    %1486 = vst.msk [vmem:[#allocation3 + $0x110] sm:$0xff] %vm1450, 0.0
    %1487 = vst.msk [vmem:[#allocation3 + $0x118] sm:$0x3] %vm1452, 0.0
    %1488 = vst.msk [vmem:[#allocation3 + $0x120] sm:$0xff] %vm1450, 0.0
    %1489 = vst.msk [vmem:[#allocation3 + $0x128] sm:$0x3] %vm1452, 0.0
    %1490 = vst.msk [vmem:[#allocation3 + $0x130] sm:$0xff] %vm1450, 0.0
    %1491 = vst.msk [vmem:[#allocation3 + $0x138] sm:$0x3] %vm1452, 0.0
    %s1492 = scalar_lea.vmem [#allocation3], 16
    %1493 = vst.msk [vmem:[%s1492 + $0x1] sm:$0xff] %vm1450, %v1434
    %1494 = vst.msk [vmem:[%s1492 + $0x11] sm:$0xff] %vm1450, %v1435
    %1495 = vst.msk [vmem:[%s1492 + $0x21] sm:$0xff] %vm1450, %v1436
    %1496 = vst.msk [vmem:[%s1492 + $0x31] sm:$0xff] %vm1450, %v1437
    %1497 = vst.msk [vmem:[%s1492 + $0x41] sm:$0xff] %vm1450, %v1438
    %1498 = vst.msk [vmem:[%s1492 + $0x51] sm:$0xff] %vm1450, %v1439
    %1499 = vst.msk [vmem:[%s1492 + $0x61] sm:$0xff] %vm1450, %v1440
    %1500 = vst.msk [vmem:[%s1492 + $0x71] sm:$0xff] %vm1450, %v1441
    %1501 = vst.msk [vmem:[%s1492 + $0xa1] sm:$0xff] %vm1450, %v1442
    %1502 = vst.msk [vmem:[%s1492 + $0xb1] sm:$0xff] %vm1450, %v1443
    %1503 = vst.msk [vmem:[%s1492 + $0xc1] sm:$0xff] %vm1450, %v1444
    %1504 = vst.msk [vmem:[%s1492 + $0xd1] sm:$0xff] %vm1450, %v1445
    %1505 = vst.msk [vmem:[%s1492 + $0xe1] sm:$0xff] %vm1450, %v1446
    %1506 = vst.msk [vmem:[%s1492 + $0xf1] sm:$0xff] %vm1450, %v1447
    %1507 = vst.msk [vmem:[%s1492 + $0x101] sm:$0xff] %vm1450, %v1448
    %1508 = vst.msk [vmem:[%s1492 + $0x111] sm:$0xff] %vm1450, %v1449
    %v1509 = vld [vmem:[#allocation3] sm:$0xff]
    %v1510 = vld [vmem:[#allocation3 + $0x8] sm:$0x3]
    %v1511 = vld [vmem:[#allocation3 + $0x10] sm:$0xff]
    %v1512 = vld [vmem:[#allocation3 + $0x18] sm:$0x3]
    %v1513 = vld [vmem:[#allocation3 + $0x20] sm:$0xff]
    %v1514 = vld [vmem:[#allocation3 + $0x28] sm:$0x3]
    %v1515 = vld [vmem:[#allocation3 + $0x30] sm:$0xff]
    %v1516 = vld [vmem:[#allocation3 + $0x38] sm:$0x3]
    %v1517 = vld [vmem:[#allocation3 + $0x40] sm:$0xff]
    %v1518 = vld [vmem:[#allocation3 + $0x48] sm:$0x3]
    %v1519 = vld [vmem:[#allocation3 + $0x50] sm:$0xff]
    %v1520 = vld [vmem:[#allocation3 + $0x58] sm:$0x3]
    %v1521 = vld [vmem:[#allocation3 + $0x60] sm:$0xff]
    %v1522 = vld [vmem:[#allocation3 + $0x68] sm:$0x3]
    %v1523 = vld [vmem:[#allocation3 + $0x70] sm:$0xff]
    %v1524 = vld [vmem:[#allocation3 + $0x78] sm:$0x3]
    %v1525 = vld [vmem:[#allocation3 + $0x80] sm:$0xff]
    %v1526 = vld [vmem:[#allocation3 + $0x88] sm:$0x3]
    %v1527 = vld [vmem:[#allocation3 + $0x90] sm:$0xff]
    %v1528 = vld [vmem:[#allocation3 + $0x98] sm:$0x3]
    %v1529 = vld [vmem:[#allocation3 + $0xa0] sm:$0xff]
    %v1530 = vld [vmem:[#allocation3 + $0xa8] sm:$0x3]
    %v1531 = vld [vmem:[#allocation3 + $0xb0] sm:$0xff]
    %v1532 = vld [vmem:[#allocation3 + $0xb8] sm:$0x3]
    %v1533 = vld [vmem:[#allocation3 + $0xc0] sm:$0xff]
    %v1534 = vld [vmem:[#allocation3 + $0xc8] sm:$0x3]
    %v1535 = vld [vmem:[#allocation3 + $0xd0] sm:$0xff]
    %v1536 = vld [vmem:[#allocation3 + $0xd8] sm:$0x3]
    %v1537 = vld [vmem:[#allocation3 + $0xe0] sm:$0xff]
    %v1538 = vld [vmem:[#allocation3 + $0xe8] sm:$0x3]
    %v1539 = vld [vmem:[#allocation3 + $0xf0] sm:$0xff]
    %v1540 = vld [vmem:[#allocation3 + $0xf8] sm:$0x3]
    %v1541 = vld [vmem:[#allocation3 + $0x100] sm:$0xff]
    %v1542 = vld [vmem:[#allocation3 + $0x108] sm:$0x3]
    %v1543 = vld [vmem:[#allocation3 + $0x110] sm:$0xff]
    %v1544 = vld [vmem:[#allocation3 + $0x118] sm:$0x3]
    %v1545 = vld [vmem:[#allocation3 + $0x120] sm:$0xff]
    %v1546 = vld [vmem:[#allocation3 + $0x128] sm:$0x3]
    %v1547 = vld [vmem:[#allocation3 + $0x130] sm:$0xff]
    %v1548 = vld [vmem:[#allocation3 + $0x138] sm:$0x3]
    %v1549 = vpack.c.bf16 %v1511, %v1509
    %v1550 = vpack.c.bf16 %v1515, %v1513
    %v1551 = vpack.c.bf16 %v1519, %v1517
    %v1552 = vpack.c.bf16 %v1523, %v1521
    %v1553 = vpack.c.bf16 %v1531, %v1529
    %v1554 = vpack.c.bf16 %v1535, %v1533
    %v1555 = vpack.c.bf16 %v1539, %v1537
    %v1556 = vpack.c.bf16 %v1543, %v1541
    %v1557 = vld [vmem:[#allocation8] sm:$0xf]
    %v1558 = vld [vmem:[#allocation8 + $0x4] sm:$0xf]
    %v1559 = vld [vmem:[#allocation8 + $0x8] sm:$0xf]
    %v1560 = vld [vmem:[#allocation8 + $0xc] sm:$0xf]
    %v1593 = vrot.slane %v1509, 1
    %v1594 = vrot.slane %v1510, 1
    %v1595 = vsel %vm385, %v1593, %v1594
    %v1596 = vrot.slane %v1511, 1
    %v1597 = vrot.slane %v1512, 1
    %v1598 = vsel %vm385, %v1596, %v1597
    %v1599 = vrot.slane %v1513, 1
    %v1600 = vrot.slane %v1514, 1
    %v1601 = vsel %vm385, %v1599, %v1600
    %v1602 = vrot.slane %v1515, 1
    %v1603 = vrot.slane %v1516, 1
    %v1604 = vsel %vm385, %v1602, %v1603
    %v1605 = vrot.slane %v1517, 1
    %v1606 = vrot.slane %v1518, 1
    %v1607 = vsel %vm385, %v1605, %v1606
    %v1608 = vrot.slane %v1519, 1
    %v1609 = vrot.slane %v1520, 1
    %v1610 = vsel %vm385, %v1608, %v1609
    %v1611 = vrot.slane %v1521, 1
    %v1612 = vrot.slane %v1522, 1
    %v1613 = vsel %vm385, %v1611, %v1612
    %v1614 = vrot.slane %v1523, 1
    %v1615 = vrot.slane %v1524, 1
    %v1616 = vsel %vm385, %v1614, %v1615
    %v1617 = vrot.slane %v1529, 1
    %v1618 = vrot.slane %v1530, 1
    %v1619 = vsel %vm385, %v1617, %v1618
    %v1620 = vrot.slane %v1531, 1
    %v1621 = vrot.slane %v1532, 1
    %v1622 = vsel %vm385, %v1620, %v1621
    %v1623 = vrot.slane %v1533, 1
    %v1624 = vrot.slane %v1534, 1
    %v1625 = vsel %vm385, %v1623, %v1624
    %v1626 = vrot.slane %v1535, 1
    %v1627 = vrot.slane %v1536, 1
    %v1628 = vsel %vm385, %v1626, %v1627
    %v1629 = vrot.slane %v1537, 1
    %v1630 = vrot.slane %v1538, 1
    %v1631 = vsel %vm385, %v1629, %v1630
    %v1632 = vrot.slane %v1539, 1
    %v1633 = vrot.slane %v1540, 1
    %v1634 = vsel %vm385, %v1632, %v1633
    %v1635 = vrot.slane %v1541, 1
    %v1636 = vrot.slane %v1542, 1
    %v1637 = vsel %vm385, %v1635, %v1636
    %v1638 = vrot.slane %v1543, 1
    %v1639 = vrot.slane %v1544, 1
    %v1640 = vsel %vm385, %v1638, %v1639
    %v1657 = vpack.c.bf16 %v1598, %v1595
    %v1658 = vpack.c.bf16 %v1604, %v1601
    %v1659 = vpack.c.bf16 %v1610, %v1607
    %v1660 = vpack.c.bf16 %v1616, %v1613
    %v1661 = vpack.c.bf16 %v1622, %v1619
    %v1662 = vpack.c.bf16 %v1628, %v1625
    %v1663 = vpack.c.bf16 %v1634, %v1631
    %v1664 = vpack.c.bf16 %v1640, %v1637
    %s1665 = scalar_lea.vmem [#allocation8], 16
    %v1666 = vld [vmem:[%s1665] sm:$0xf]
    %v1667 = vld [vmem:[%s1665 + $0x4] sm:$0xf]
    %v1668 = vld [vmem:[%s1665 + $0x8] sm:$0xf]
    %v1669 = vld [vmem:[%s1665 + $0xc] sm:$0xf]
    %v1674 = vunpack.c.l.b16 %v1666
    %v1675 = vunpack.c.l.b16 %v1667
    %v1676 = vunpack.c.l.b16 %v1668
    %v1677 = vunpack.c.l.b16 %v1669
    %v1678 = vpack.c.b16 %v1675, %v1674
    %v1679 = vpack.c.b16 %v1677, %v1676
    %v1683 = vsel %vm1450, %v1657, 0
    %v1686 = vsel %vm1450, %v1658, 0
    %v1689 = vsel %vm1450, %v1659, 0
    %v1692 = vsel %vm1450, %v1660, 0
    %v1695 = vsel %vm1450, %v1661, 0
    %v1698 = vsel %vm1450, %v1662, 0
    %v1701 = vsel %vm1450, %v1663, 0
    %v1704 = vsel %vm1450, %v1664, 0
    %1706 = vmatpush.bf16.msra.mxu0 0
    %1707 = vmatpush.bf16.msra.mxu0 0
    %1708 = vmatpush.bf16.msra.mxu0 0
    %1709 = vmatpush.bf16.msra.mxu0 0
    %1710 = vmatpush.bf16.msra.mxu0 0
    %1711 = vmatpush.bf16.msra.mxu0 0
    %1712 = vmatpush.bf16.msra.mxu0 %v1679
    %1713 = vmatpush.bf16.msra.mxu0 %v1678
    %1714 = vmatmul.bf16.gmra.mxu0 %v1683
    %v1715 = vpop.f32.mrf.mxu0
    %v1716 = vadd.f32 0.0, %v1715
    %v1717 = vpop.f32.mrf.mxu0
    %v1718 = vadd.f32 0.0, %v1717
    %1719 = vmatmul.bf16.gmra.mxu0 %v1686
    %v1720 = vpop.f32.mrf.mxu0
    %v1721 = vadd.f32 0.0, %v1720
    %v1722 = vpop.f32.mrf.mxu0
    %v1723 = vadd.f32 0.0, %v1722
    %1724 = vmatmul.bf16.gmra.mxu0 %v1689
    %v1725 = vpop.f32.mrf.mxu0
    %v1726 = vadd.f32 0.0, %v1725
    %v1727 = vpop.f32.mrf.mxu0
    %v1728 = vadd.f32 0.0, %v1727
    %1729 = vmatmul.bf16.gmra.mxu0 %v1692
    %v1730 = vpop.f32.mrf.mxu0
    %v1731 = vadd.f32 0.0, %v1730
    %v1732 = vpop.f32.mrf.mxu0
    %v1733 = vadd.f32 0.0, %v1732
    %1734 = vmatmul.bf16.gmra.mxu0 %v1695
    %v1735 = vpop.f32.mrf.mxu0
    %v1736 = vadd.f32 0.0, %v1735
    %v1737 = vpop.f32.mrf.mxu0
    %v1738 = vadd.f32 0.0, %v1737
    %1739 = vmatmul.bf16.gmra.mxu0 %v1698
    %v1740 = vpop.f32.mrf.mxu0
    %v1741 = vadd.f32 0.0, %v1740
    %v1742 = vpop.f32.mrf.mxu0
    %v1743 = vadd.f32 0.0, %v1742
    %1744 = vmatmul.bf16.gmra.mxu0 %v1701
    %v1745 = vpop.f32.mrf.mxu0
    %v1746 = vadd.f32 0.0, %v1745
    %v1747 = vpop.f32.mrf.mxu0
    %v1748 = vadd.f32 0.0, %v1747
    %1749 = vmatmul.bf16.gmra.mxu0 %v1704
    %v1750 = vpop.f32.mrf.mxu0
    %v1751 = vadd.f32 0.0, %v1750
    %v1752 = vpop.f32.mrf.mxu0
    %v1753 = vadd.f32 0.0, %v1752
    %1754 = vdwg.mxu0
    %v1759 = vunpack.c.l.b16 %v1557
    %v1760 = vunpack.c.l.b16 %v1558
    %v1761 = vunpack.c.l.b16 %v1559
    %v1762 = vunpack.c.l.b16 %v1560
    %v1763 = vpack.c.b16 %v1760, %v1759
    %v1764 = vpack.c.b16 %v1762, %v1761
    %v1768 = vsel %vm1450, %v1549, 0
    %v1771 = vsel %vm1450, %v1550, 0
    %v1774 = vsel %vm1450, %v1551, 0
    %v1777 = vsel %vm1450, %v1552, 0
    %v1780 = vsel %vm1450, %v1553, 0
    %v1783 = vsel %vm1450, %v1554, 0
    %v1786 = vsel %vm1450, %v1555, 0
    %v1789 = vsel %vm1450, %v1556, 0
    %1791 = vmatpush.bf16.msra.mxu0 0
    %1792 = vmatpush.bf16.msra.mxu0 0
    %1793 = vmatpush.bf16.msra.mxu0 0
    %1794 = vmatpush.bf16.msra.mxu0 0
    %1795 = vmatpush.bf16.msra.mxu0 0
    %1796 = vmatpush.bf16.msra.mxu0 0
    %1797 = vmatpush.bf16.msra.mxu0 %v1764
    %1798 = vmatpush.bf16.msra.mxu0 %v1763
    %1799 = vmatmul.bf16.gmra.mxu0 %v1768
    %v1800 = vpop.f32.mrf.mxu0
    %v1801 = vadd.f32 %v1716, %v1800
    %v1802 = vpop.f32.mrf.mxu0
    %v1803 = vadd.f32 %v1718, %v1802
    %1804 = vmatmul.bf16.gmra.mxu0 %v1771
    %v1805 = vpop.f32.mrf.mxu0
    %v1806 = vadd.f32 %v1721, %v1805
    %v1807 = vpop.f32.mrf.mxu0
    %v1808 = vadd.f32 %v1723, %v1807
    %1809 = vmatmul.bf16.gmra.mxu0 %v1774
    %v1810 = vpop.f32.mrf.mxu0
    %v1811 = vadd.f32 %v1726, %v1810
    %v1812 = vpop.f32.mrf.mxu0
    %v1813 = vadd.f32 %v1728, %v1812
    %1814 = vmatmul.bf16.gmra.mxu0 %v1777
    %v1815 = vpop.f32.mrf.mxu0
    %v1816 = vadd.f32 %v1731, %v1815
    %v1817 = vpop.f32.mrf.mxu0
    %v1818 = vadd.f32 %v1733, %v1817
    %1819 = vmatmul.bf16.gmra.mxu0 %v1780
    %v1820 = vpop.f32.mrf.mxu0
    %v1821 = vadd.f32 %v1736, %v1820
    %v1822 = vpop.f32.mrf.mxu0
    %v1823 = vadd.f32 %v1738, %v1822
    %1824 = vmatmul.bf16.gmra.mxu0 %v1783
    %v1825 = vpop.f32.mrf.mxu0
    %v1826 = vadd.f32 %v1741, %v1825
    %v1827 = vpop.f32.mrf.mxu0
    %v1828 = vadd.f32 %v1743, %v1827
    %1829 = vmatmul.bf16.gmra.mxu0 %v1786
    %v1830 = vpop.f32.mrf.mxu0
    %v1831 = vadd.f32 %v1746, %v1830
    %v1832 = vpop.f32.mrf.mxu0
    %v1833 = vadd.f32 %v1748, %v1832
    %1834 = vmatmul.bf16.gmra.mxu0 %v1789
    %v1835 = vpop.f32.mrf.mxu0
    %v1836 = vadd.f32 %v1751, %v1835
    %v1837 = vpop.f32.mrf.mxu0
    %v1838 = vadd.f32 %v1753, %v1837
    %1839 = vdwg.mxu0
    %v1840 = vrot.slane %v1509, 2
    %v1841 = vrot.slane %v1510, 2
    %v1842 = vsel %vm619, %v1840, %v1841
    %v1843 = vrot.slane %v1511, 2
    %v1844 = vrot.slane %v1512, 2
    %v1845 = vsel %vm619, %v1843, %v1844
    %v1846 = vrot.slane %v1513, 2
    %v1847 = vrot.slane %v1514, 2
    %v1848 = vsel %vm619, %v1846, %v1847
    %v1849 = vrot.slane %v1515, 2
    %v1850 = vrot.slane %v1516, 2
    %v1851 = vsel %vm619, %v1849, %v1850
    %v1852 = vrot.slane %v1517, 2
    %v1853 = vrot.slane %v1518, 2
    %v1854 = vsel %vm619, %v1852, %v1853
    %v1855 = vrot.slane %v1519, 2
    %v1856 = vrot.slane %v1520, 2
    %v1857 = vsel %vm619, %v1855, %v1856
    %v1858 = vrot.slane %v1521, 2
    %v1859 = vrot.slane %v1522, 2
    %v1860 = vsel %vm619, %v1858, %v1859
    %v1861 = vrot.slane %v1523, 2
    %v1862 = vrot.slane %v1524, 2
    %v1863 = vsel %vm619, %v1861, %v1862
    %v1864 = vrot.slane %v1529, 2
    %v1865 = vrot.slane %v1530, 2
    %v1866 = vsel %vm619, %v1864, %v1865
    %v1867 = vrot.slane %v1531, 2
    %v1868 = vrot.slane %v1532, 2
    %v1869 = vsel %vm619, %v1867, %v1868
    %v1870 = vrot.slane %v1533, 2
    %v1871 = vrot.slane %v1534, 2
    %v1872 = vsel %vm619, %v1870, %v1871
    %v1873 = vrot.slane %v1535, 2
    %v1874 = vrot.slane %v1536, 2
    %v1875 = vsel %vm619, %v1873, %v1874
    %v1876 = vrot.slane %v1537, 2
    %v1877 = vrot.slane %v1538, 2
    %v1878 = vsel %vm619, %v1876, %v1877
    %v1879 = vrot.slane %v1539, 2
    %v1880 = vrot.slane %v1540, 2
    %v1881 = vsel %vm619, %v1879, %v1880
    %v1882 = vrot.slane %v1541, 2
    %v1883 = vrot.slane %v1542, 2
    %v1884 = vsel %vm619, %v1882, %v1883
    %v1885 = vrot.slane %v1543, 2
    %v1886 = vrot.slane %v1544, 2
    %v1887 = vsel %vm619, %v1885, %v1886
    %v1904 = vpack.c.bf16 %v1845, %v1842
    %v1905 = vpack.c.bf16 %v1851, %v1848
    %v1906 = vpack.c.bf16 %v1857, %v1854
    %v1907 = vpack.c.bf16 %v1863, %v1860
    %v1908 = vpack.c.bf16 %v1869, %v1866
    %v1909 = vpack.c.bf16 %v1875, %v1872
    %v1910 = vpack.c.bf16 %v1881, %v1878
    %v1911 = vpack.c.bf16 %v1887, %v1884
    %s1912 = scalar_lea.vmem [#allocation8], 32
    %v1913 = vld [vmem:[%s1912] sm:$0xf]
    %v1914 = vld [vmem:[%s1912 + $0x4] sm:$0xf]
    %v1915 = vld [vmem:[%s1912 + $0x8] sm:$0xf]
    %v1916 = vld [vmem:[%s1912 + $0xc] sm:$0xf]
    %v1921 = vunpack.c.l.b16 %v1913
    %v1922 = vunpack.c.l.b16 %v1914
    %v1923 = vunpack.c.l.b16 %v1915
    %v1924 = vunpack.c.l.b16 %v1916
    %v1925 = vpack.c.b16 %v1922, %v1921
    %v1926 = vpack.c.b16 %v1924, %v1923
    %v1930 = vsel %vm1450, %v1904, 0
    %v1933 = vsel %vm1450, %v1905, 0
    %v1936 = vsel %vm1450, %v1906, 0
    %v1939 = vsel %vm1450, %v1907, 0
    %v1942 = vsel %vm1450, %v1908, 0
    %v1945 = vsel %vm1450, %v1909, 0
    %v1948 = vsel %vm1450, %v1910, 0
    %v1951 = vsel %vm1450, %v1911, 0
    %1953 = vmatpush.bf16.msra.mxu0 0
    %1954 = vmatpush.bf16.msra.mxu0 0
    %1955 = vmatpush.bf16.msra.mxu0 0
    %1956 = vmatpush.bf16.msra.mxu0 0
    %1957 = vmatpush.bf16.msra.mxu0 0
    %1958 = vmatpush.bf16.msra.mxu0 0
    %1959 = vmatpush.bf16.msra.mxu0 %v1926
    %1960 = vmatpush.bf16.msra.mxu0 %v1925
    %1961 = vmatmul.bf16.gmra.mxu0 %v1930
    %v1962 = vpop.f32.mrf.mxu0
    %v1963 = vadd.f32 0.0, %v1962
    %v1964 = vpop.f32.mrf.mxu0
    %v1965 = vadd.f32 0.0, %v1964
    %1966 = vmatmul.bf16.gmra.mxu0 %v1933
    %v1967 = vpop.f32.mrf.mxu0
    %v1968 = vadd.f32 0.0, %v1967
    %v1969 = vpop.f32.mrf.mxu0
    %v1970 = vadd.f32 0.0, %v1969
    %1971 = vmatmul.bf16.gmra.mxu0 %v1936
    %v1972 = vpop.f32.mrf.mxu0
    %v1973 = vadd.f32 0.0, %v1972
    %v1974 = vpop.f32.mrf.mxu0
    %v1975 = vadd.f32 0.0, %v1974
    %1976 = vmatmul.bf16.gmra.mxu0 %v1939
    %v1977 = vpop.f32.mrf.mxu0
    %v1978 = vadd.f32 0.0, %v1977
    %v1979 = vpop.f32.mrf.mxu0
    %v1980 = vadd.f32 0.0, %v1979
    %1981 = vmatmul.bf16.gmra.mxu0 %v1942
    %v1982 = vpop.f32.mrf.mxu0
    %v1983 = vadd.f32 0.0, %v1982
    %v1984 = vpop.f32.mrf.mxu0
    %v1985 = vadd.f32 0.0, %v1984
    %1986 = vmatmul.bf16.gmra.mxu0 %v1945
    %v1987 = vpop.f32.mrf.mxu0
    %v1988 = vadd.f32 0.0, %v1987
    %v1989 = vpop.f32.mrf.mxu0
    %v1990 = vadd.f32 0.0, %v1989
    %1991 = vmatmul.bf16.gmra.mxu0 %v1948
    %v1992 = vpop.f32.mrf.mxu0
    %v1993 = vadd.f32 0.0, %v1992
    %v1994 = vpop.f32.mrf.mxu0
    %v1995 = vadd.f32 0.0, %v1994
    %1996 = vmatmul.bf16.gmra.mxu0 %v1951
    %v1997 = vpop.f32.mrf.mxu0
    %v1998 = vadd.f32 0.0, %v1997
    %v1999 = vpop.f32.mrf.mxu0
    %v2000 = vadd.f32 0.0, %v1999
    %2001 = vdwg.mxu0
    %v2002 = vadd.f32 %v1801, %v1963
    %v2003 = vadd.f32 %v1803, %v1965
    %v2004 = vadd.f32 %v1806, %v1968
    %v2005 = vadd.f32 %v1808, %v1970
    %v2006 = vadd.f32 %v1811, %v1973
    %v2007 = vadd.f32 %v1813, %v1975
    %v2008 = vadd.f32 %v1816, %v1978
    %v2009 = vadd.f32 %v1818, %v1980
    %v2010 = vadd.f32 %v1821, %v1983
    %v2011 = vadd.f32 %v1823, %v1985
    %v2012 = vadd.f32 %v1826, %v1988
    %v2013 = vadd.f32 %v1828, %v1990
    %v2014 = vadd.f32 %v1831, %v1993
    %v2015 = vadd.f32 %v1833, %v1995
    %v2016 = vadd.f32 %v1836, %v1998
    %v2017 = vadd.f32 %v1838, %v2000
    %v2018 = vpack.c.bf16 %v1513, %v1511
    %v2019 = vpack.c.bf16 %v1517, %v1515
    %v2020 = vpack.c.bf16 %v1521, %v1519
    %v2021 = vpack.c.bf16 %v1525, %v1523
    %v2022 = vpack.c.bf16 %v1533, %v1531
    %v2023 = vpack.c.bf16 %v1537, %v1535
    %v2024 = vpack.c.bf16 %v1541, %v1539
    %v2025 = vpack.c.bf16 %v1545, %v1543
    %s2026 = scalar_lea.vmem [#allocation8], 48
    %v2027 = vld [vmem:[%s2026] sm:$0xf]
    %v2028 = vld [vmem:[%s2026 + $0x4] sm:$0xf]
    %v2029 = vld [vmem:[%s2026 + $0x8] sm:$0xf]
    %v2030 = vld [vmem:[%s2026 + $0xc] sm:$0xf]
    %v2035 = vunpack.c.l.b16 %v2027
    %v2036 = vunpack.c.l.b16 %v2028
    %v2037 = vunpack.c.l.b16 %v2029
    %v2038 = vunpack.c.l.b16 %v2030
    %v2039 = vpack.c.b16 %v2036, %v2035
    %v2040 = vpack.c.b16 %v2038, %v2037
    %v2044 = vsel %vm1450, %v2018, 0
    %v2047 = vsel %vm1450, %v2019, 0
    %v2050 = vsel %vm1450, %v2020, 0
    %v2053 = vsel %vm1450, %v2021, 0
    %v2056 = vsel %vm1450, %v2022, 0
    %v2059 = vsel %vm1450, %v2023, 0
    %v2062 = vsel %vm1450, %v2024, 0
    %v2065 = vsel %vm1450, %v2025, 0
    %2067 = vmatpush.bf16.msra.mxu0 0
    %2068 = vmatpush.bf16.msra.mxu0 0
    %2069 = vmatpush.bf16.msra.mxu0 0
    %2070 = vmatpush.bf16.msra.mxu0 0
    %2071 = vmatpush.bf16.msra.mxu0 0
    %2072 = vmatpush.bf16.msra.mxu0 0
    %2073 = vmatpush.bf16.msra.mxu0 %v2040
    %2074 = vmatpush.bf16.msra.mxu0 %v2039
    %2075 = vmatmul.bf16.gmra.mxu0 %v2044
    %v2076 = vpop.f32.mrf.mxu0
    %v2077 = vadd.f32 0.0, %v2076
    %v2078 = vpop.f32.mrf.mxu0
    %v2079 = vadd.f32 0.0, %v2078
    %2080 = vmatmul.bf16.gmra.mxu0 %v2047
    %v2081 = vpop.f32.mrf.mxu0
    %v2082 = vadd.f32 0.0, %v2081
    %v2083 = vpop.f32.mrf.mxu0
    %v2084 = vadd.f32 0.0, %v2083
    %2085 = vmatmul.bf16.gmra.mxu0 %v2050
    %v2086 = vpop.f32.mrf.mxu0
    %v2087 = vadd.f32 0.0, %v2086
    %v2088 = vpop.f32.mrf.mxu0
    %v2089 = vadd.f32 0.0, %v2088
    %2090 = vmatmul.bf16.gmra.mxu0 %v2053
    %v2091 = vpop.f32.mrf.mxu0
    %v2092 = vadd.f32 0.0, %v2091
    %v2093 = vpop.f32.mrf.mxu0
    %v2094 = vadd.f32 0.0, %v2093
    %2095 = vmatmul.bf16.gmra.mxu0 %v2056
    %v2096 = vpop.f32.mrf.mxu0
    %v2097 = vadd.f32 0.0, %v2096
    %v2098 = vpop.f32.mrf.mxu0
    %v2099 = vadd.f32 0.0, %v2098
    %2100 = vmatmul.bf16.gmra.mxu0 %v2059
    %v2101 = vpop.f32.mrf.mxu0
    %v2102 = vadd.f32 0.0, %v2101
    %v2103 = vpop.f32.mrf.mxu0
    %v2104 = vadd.f32 0.0, %v2103
    %2105 = vmatmul.bf16.gmra.mxu0 %v2062
    %v2106 = vpop.f32.mrf.mxu0
    %v2107 = vadd.f32 0.0, %v2106
    %v2108 = vpop.f32.mrf.mxu0
    %v2109 = vadd.f32 0.0, %v2108
    %2110 = vmatmul.bf16.gmra.mxu0 %v2065
    %v2111 = vpop.f32.mrf.mxu0
    %v2112 = vadd.f32 0.0, %v2111
    %v2113 = vpop.f32.mrf.mxu0
    %v2114 = vadd.f32 0.0, %v2113
    %2115 = vdwg.mxu0
    %v2116 = vadd.f32 %v2002, %v2077
    %v2117 = vadd.f32 %v2003, %v2079
    %v2118 = vadd.f32 %v2004, %v2082
    %v2119 = vadd.f32 %v2005, %v2084
    %v2120 = vadd.f32 %v2006, %v2087
    %v2121 = vadd.f32 %v2007, %v2089
    %v2122 = vadd.f32 %v2008, %v2092
    %v2123 = vadd.f32 %v2009, %v2094
    %v2124 = vadd.f32 %v2010, %v2097
    %v2125 = vadd.f32 %v2011, %v2099
    %v2126 = vadd.f32 %v2012, %v2102
    %v2127 = vadd.f32 %v2013, %v2104
    %v2128 = vadd.f32 %v2014, %v2107
    %v2129 = vadd.f32 %v2015, %v2109
    %v2130 = vadd.f32 %v2016, %v2112
    %v2131 = vadd.f32 %v2017, %v2114
    %v2136 = vrot.slane %v1525, 1
    %v2137 = vrot.slane %v1526, 1
    %v2138 = vsel %vm385, %v2136, %v2137
    %v2139 = vrot.slane %v1545, 1
    %v2140 = vrot.slane %v1546, 1
    %v2141 = vsel %vm385, %v2139, %v2140
    %v2144 = vpack.c.bf16 %v1601, %v1598
    %v2145 = vpack.c.bf16 %v1607, %v1604
    %v2146 = vpack.c.bf16 %v1613, %v1610
    %v2147 = vpack.c.bf16 %v2138, %v1616
    %v2148 = vpack.c.bf16 %v1625, %v1622
    %v2149 = vpack.c.bf16 %v1631, %v1628
    %v2150 = vpack.c.bf16 %v1637, %v1634
    %v2151 = vpack.c.bf16 %v2141, %v1640
    %s2152 = scalar_lea.vmem [#allocation8], 64
    %v2153 = vld [vmem:[%s2152] sm:$0xf]
    %v2154 = vld [vmem:[%s2152 + $0x4] sm:$0xf]
    %v2155 = vld [vmem:[%s2152 + $0x8] sm:$0xf]
    %v2156 = vld [vmem:[%s2152 + $0xc] sm:$0xf]
    %v2161 = vunpack.c.l.b16 %v2153
    %v2162 = vunpack.c.l.b16 %v2154
    %v2163 = vunpack.c.l.b16 %v2155
    %v2164 = vunpack.c.l.b16 %v2156
    %v2165 = vpack.c.b16 %v2162, %v2161
    %v2166 = vpack.c.b16 %v2164, %v2163
    %v2170 = vsel %vm1450, %v2144, 0
    %v2173 = vsel %vm1450, %v2145, 0
    %v2176 = vsel %vm1450, %v2146, 0
    %v2179 = vsel %vm1450, %v2147, 0
    %v2182 = vsel %vm1450, %v2148, 0
    %v2185 = vsel %vm1450, %v2149, 0
    %v2188 = vsel %vm1450, %v2150, 0
    %v2191 = vsel %vm1450, %v2151, 0
    %2193 = vmatpush.bf16.msra.mxu0 0
    %2194 = vmatpush.bf16.msra.mxu0 0
    %2195 = vmatpush.bf16.msra.mxu0 0
    %2196 = vmatpush.bf16.msra.mxu0 0
    %2197 = vmatpush.bf16.msra.mxu0 0
    %2198 = vmatpush.bf16.msra.mxu0 0
    %2199 = vmatpush.bf16.msra.mxu0 %v2166
    %2200 = vmatpush.bf16.msra.mxu0 %v2165
    %2201 = vmatmul.bf16.gmra.mxu0 %v2170
    %v2202 = vpop.f32.mrf.mxu0
    %v2203 = vadd.f32 0.0, %v2202
    %v2204 = vpop.f32.mrf.mxu0
    %v2205 = vadd.f32 0.0, %v2204
    %2206 = vmatmul.bf16.gmra.mxu0 %v2173
    %v2207 = vpop.f32.mrf.mxu0
    %v2208 = vadd.f32 0.0, %v2207
    %v2209 = vpop.f32.mrf.mxu0
    %v2210 = vadd.f32 0.0, %v2209
    %2211 = vmatmul.bf16.gmra.mxu0 %v2176
    %v2212 = vpop.f32.mrf.mxu0
    %v2213 = vadd.f32 0.0, %v2212
    %v2214 = vpop.f32.mrf.mxu0
    %v2215 = vadd.f32 0.0, %v2214
    %2216 = vmatmul.bf16.gmra.mxu0 %v2179
    %v2217 = vpop.f32.mrf.mxu0
    %v2218 = vadd.f32 0.0, %v2217
    %v2219 = vpop.f32.mrf.mxu0
    %v2220 = vadd.f32 0.0, %v2219
    %2221 = vmatmul.bf16.gmra.mxu0 %v2182
    %v2222 = vpop.f32.mrf.mxu0
    %v2223 = vadd.f32 0.0, %v2222
    %v2224 = vpop.f32.mrf.mxu0
    %v2225 = vadd.f32 0.0, %v2224
    %2226 = vmatmul.bf16.gmra.mxu0 %v2185
    %v2227 = vpop.f32.mrf.mxu0
    %v2228 = vadd.f32 0.0, %v2227
    %v2229 = vpop.f32.mrf.mxu0
    %v2230 = vadd.f32 0.0, %v2229
    %2231 = vmatmul.bf16.gmra.mxu0 %v2188
    %v2232 = vpop.f32.mrf.mxu0
    %v2233 = vadd.f32 0.0, %v2232
    %v2234 = vpop.f32.mrf.mxu0
    %v2235 = vadd.f32 0.0, %v2234
    %2236 = vmatmul.bf16.gmra.mxu0 %v2191
    %v2237 = vpop.f32.mrf.mxu0
    %v2238 = vadd.f32 0.0, %v2237
    %v2239 = vpop.f32.mrf.mxu0
    %v2240 = vadd.f32 0.0, %v2239
    %2241 = vdwg.mxu0
    %v2242 = vadd.f32 %v2116, %v2203
    %v2243 = vadd.f32 %v2117, %v2205
    %v2244 = vadd.f32 %v2118, %v2208
    %v2245 = vadd.f32 %v2119, %v2210
    %v2246 = vadd.f32 %v2120, %v2213
    %v2247 = vadd.f32 %v2121, %v2215
    %v2248 = vadd.f32 %v2122, %v2218
    %v2249 = vadd.f32 %v2123, %v2220
    %v2250 = vadd.f32 %v2124, %v2223
    %v2251 = vadd.f32 %v2125, %v2225
    %v2252 = vadd.f32 %v2126, %v2228
    %v2253 = vadd.f32 %v2127, %v2230
    %v2254 = vadd.f32 %v2128, %v2233
    %v2255 = vadd.f32 %v2129, %v2235
    %v2256 = vadd.f32 %v2130, %v2238
    %v2257 = vadd.f32 %v2131, %v2240
    %v2258 = vrot.slane %v1525, 2
    %v2259 = vrot.slane %v1526, 2
    %v2260 = vsel %vm619, %v2258, %v2259
    %v2261 = vrot.slane %v1545, 2
    %v2262 = vrot.slane %v1546, 2
    %v2263 = vsel %vm619, %v2261, %v2262
    %v2266 = vpack.c.bf16 %v1848, %v1845
    %v2267 = vpack.c.bf16 %v1854, %v1851
    %v2268 = vpack.c.bf16 %v1860, %v1857
    %v2269 = vpack.c.bf16 %v2260, %v1863
    %v2270 = vpack.c.bf16 %v1872, %v1869
    %v2271 = vpack.c.bf16 %v1878, %v1875
    %v2272 = vpack.c.bf16 %v1884, %v1881
    %v2273 = vpack.c.bf16 %v2263, %v1887
    %s2274 = scalar_lea.vmem [#allocation8], 80
    %v2275 = vld [vmem:[%s2274] sm:$0xf]
    %v2276 = vld [vmem:[%s2274 + $0x4] sm:$0xf]
    %v2277 = vld [vmem:[%s2274 + $0x8] sm:$0xf]
    %v2278 = vld [vmem:[%s2274 + $0xc] sm:$0xf]
    %v2283 = vunpack.c.l.b16 %v2275
    %v2284 = vunpack.c.l.b16 %v2276
    %v2285 = vunpack.c.l.b16 %v2277
    %v2286 = vunpack.c.l.b16 %v2278
    %v2287 = vpack.c.b16 %v2284, %v2283
    %v2288 = vpack.c.b16 %v2286, %v2285
    %v2292 = vsel %vm1450, %v2266, 0
    %v2295 = vsel %vm1450, %v2267, 0
    %v2298 = vsel %vm1450, %v2268, 0
    %v2301 = vsel %vm1450, %v2269, 0
    %v2304 = vsel %vm1450, %v2270, 0
    %v2307 = vsel %vm1450, %v2271, 0
    %v2310 = vsel %vm1450, %v2272, 0
    %v2313 = vsel %vm1450, %v2273, 0
    %2315 = vmatpush.bf16.msra.mxu0 0
    %2316 = vmatpush.bf16.msra.mxu0 0
    %2317 = vmatpush.bf16.msra.mxu0 0
    %2318 = vmatpush.bf16.msra.mxu0 0
    %2319 = vmatpush.bf16.msra.mxu0 0
    %2320 = vmatpush.bf16.msra.mxu0 0
    %2321 = vmatpush.bf16.msra.mxu0 %v2288
    %2322 = vmatpush.bf16.msra.mxu0 %v2287
    %2323 = vmatmul.bf16.gmra.mxu0 %v2292
    %v2324 = vpop.f32.mrf.mxu0
    %v2325 = vadd.f32 0.0, %v2324
    %v2326 = vpop.f32.mrf.mxu0
    %v2327 = vadd.f32 0.0, %v2326
    %2328 = vmatmul.bf16.gmra.mxu0 %v2295
    %v2329 = vpop.f32.mrf.mxu0
    %v2330 = vadd.f32 0.0, %v2329
    %v2331 = vpop.f32.mrf.mxu0
    %v2332 = vadd.f32 0.0, %v2331
    %2333 = vmatmul.bf16.gmra.mxu0 %v2298
    %v2334 = vpop.f32.mrf.mxu0
    %v2335 = vadd.f32 0.0, %v2334
    %v2336 = vpop.f32.mrf.mxu0
    %v2337 = vadd.f32 0.0, %v2336
    %2338 = vmatmul.bf16.gmra.mxu0 %v2301
    %v2339 = vpop.f32.mrf.mxu0
    %v2340 = vadd.f32 0.0, %v2339
    %v2341 = vpop.f32.mrf.mxu0
    %v2342 = vadd.f32 0.0, %v2341
    %2343 = vmatmul.bf16.gmra.mxu0 %v2304
    %v2344 = vpop.f32.mrf.mxu0
    %v2345 = vadd.f32 0.0, %v2344
    %v2346 = vpop.f32.mrf.mxu0
    %v2347 = vadd.f32 0.0, %v2346
    %2348 = vmatmul.bf16.gmra.mxu0 %v2307
    %v2349 = vpop.f32.mrf.mxu0
    %v2350 = vadd.f32 0.0, %v2349
    %v2351 = vpop.f32.mrf.mxu0
    %v2352 = vadd.f32 0.0, %v2351
    %2353 = vmatmul.bf16.gmra.mxu0 %v2310
    %v2354 = vpop.f32.mrf.mxu0
    %v2355 = vadd.f32 0.0, %v2354
    %v2356 = vpop.f32.mrf.mxu0
    %v2357 = vadd.f32 0.0, %v2356
    %2358 = vmatmul.bf16.gmra.mxu0 %v2313
    %v2359 = vpop.f32.mrf.mxu0
    %v2360 = vadd.f32 0.0, %v2359
    %v2361 = vpop.f32.mrf.mxu0
    %v2362 = vadd.f32 0.0, %v2361
    %2363 = vdwg.mxu0
    %v2364 = vadd.f32 %v2242, %v2325
    %v2365 = vadd.f32 %v2243, %v2327
    %v2366 = vadd.f32 %v2244, %v2330
    %v2367 = vadd.f32 %v2245, %v2332
    %v2368 = vadd.f32 %v2246, %v2335
    %v2369 = vadd.f32 %v2247, %v2337
    %v2370 = vadd.f32 %v2248, %v2340
    %v2371 = vadd.f32 %v2249, %v2342
    %v2372 = vadd.f32 %v2250, %v2345
    %v2373 = vadd.f32 %v2251, %v2347
    %v2374 = vadd.f32 %v2252, %v2350
    %v2375 = vadd.f32 %v2253, %v2352
    %v2376 = vadd.f32 %v2254, %v2355
    %v2377 = vadd.f32 %v2255, %v2357
    %v2378 = vadd.f32 %v2256, %v2360
    %v2379 = vadd.f32 %v2257, %v2362
    %v2380 = vpack.c.bf16 %v1527, %v1525
    %v2381 = vpack.c.bf16 %v1547, %v1545
    %s2382 = scalar_lea.vmem [#allocation8], 96
    %v2383 = vld [vmem:[%s2382] sm:$0xf]
    %v2384 = vld [vmem:[%s2382 + $0x4] sm:$0xf]
    %v2385 = vld [vmem:[%s2382 + $0x8] sm:$0xf]
    %v2386 = vld [vmem:[%s2382 + $0xc] sm:$0xf]
    %v2391 = vunpack.c.l.b16 %v2383
    %v2392 = vunpack.c.l.b16 %v2384
    %v2393 = vunpack.c.l.b16 %v2385
    %v2394 = vunpack.c.l.b16 %v2386
    %v2395 = vpack.c.b16 %v2392, %v2391
    %v2396 = vpack.c.b16 %v2394, %v2393
    %v2400 = vsel %vm1450, %v2380, 0
    %v2403 = vsel %vm1450, %v2381, 0
    %2405 = vmatpush.bf16.msra.mxu0 0
    %2406 = vmatpush.bf16.msra.mxu0 0
    %2407 = vmatpush.bf16.msra.mxu0 0
    %2408 = vmatpush.bf16.msra.mxu0 0
    %2409 = vmatpush.bf16.msra.mxu0 0
    %2410 = vmatpush.bf16.msra.mxu0 0
    %2411 = vmatpush.bf16.msra.mxu0 %v2396
    %2412 = vmatpush.bf16.msra.mxu0 %v2395
    %2413 = vmatmul.bf16.gmra.mxu0 %v1771
    %v2414 = vpop.f32.mrf.mxu0
    %v2415 = vadd.f32 0.0, %v2414
    %v2416 = vpop.f32.mrf.mxu0
    %v2417 = vadd.f32 0.0, %v2416
    %2418 = vmatmul.bf16.gmra.mxu0 %v1774
    %v2419 = vpop.f32.mrf.mxu0
    %v2420 = vadd.f32 0.0, %v2419
    %v2421 = vpop.f32.mrf.mxu0
    %v2422 = vadd.f32 0.0, %v2421
    %2423 = vmatmul.bf16.gmra.mxu0 %v1777
    %v2424 = vpop.f32.mrf.mxu0
    %v2425 = vadd.f32 0.0, %v2424
    %v2426 = vpop.f32.mrf.mxu0
    %v2427 = vadd.f32 0.0, %v2426
    %2428 = vmatmul.bf16.gmra.mxu0 %v2400
    %v2429 = vpop.f32.mrf.mxu0
    %v2430 = vadd.f32 0.0, %v2429
    %v2431 = vpop.f32.mrf.mxu0
    %v2432 = vadd.f32 0.0, %v2431
    %2433 = vmatmul.bf16.gmra.mxu0 %v1783
    %v2434 = vpop.f32.mrf.mxu0
    %v2435 = vadd.f32 0.0, %v2434
    %v2436 = vpop.f32.mrf.mxu0
    %v2437 = vadd.f32 0.0, %v2436
    %2438 = vmatmul.bf16.gmra.mxu0 %v1786
    %v2439 = vpop.f32.mrf.mxu0
    %v2440 = vadd.f32 0.0, %v2439
    %v2441 = vpop.f32.mrf.mxu0
    %v2442 = vadd.f32 0.0, %v2441
    %2443 = vmatmul.bf16.gmra.mxu0 %v1789
    %v2444 = vpop.f32.mrf.mxu0
    %v2445 = vadd.f32 0.0, %v2444
    %v2446 = vpop.f32.mrf.mxu0
    %v2447 = vadd.f32 0.0, %v2446
    %2448 = vmatmul.bf16.gmra.mxu0 %v2403
    %v2449 = vpop.f32.mrf.mxu0
    %v2450 = vadd.f32 0.0, %v2449
    %v2451 = vpop.f32.mrf.mxu0
    %v2452 = vadd.f32 0.0, %v2451
    %2453 = vdwg.mxu0
    %v2454 = vadd.f32 %v2364, %v2415
    %v2455 = vadd.f32 %v2365, %v2417
    %v2456 = vadd.f32 %v2366, %v2420
    %v2457 = vadd.f32 %v2367, %v2422
    %v2458 = vadd.f32 %v2368, %v2425
    %v2459 = vadd.f32 %v2369, %v2427
    %v2460 = vadd.f32 %v2370, %v2430
    %v2461 = vadd.f32 %v2371, %v2432
    %v2462 = vadd.f32 %v2372, %v2435
    %v2463 = vadd.f32 %v2373, %v2437
    %v2464 = vadd.f32 %v2374, %v2440
    %v2465 = vadd.f32 %v2375, %v2442
    %v2466 = vadd.f32 %v2376, %v2445
    %v2467 = vadd.f32 %v2377, %v2447
    %v2468 = vadd.f32 %v2378, %v2450
    %v2469 = vadd.f32 %v2379, %v2452
    %v2474 = vrot.slane %v1527, 1
    %v2475 = vrot.slane %v1528, 1
    %v2476 = vsel %vm385, %v2474, %v2475
    %v2477 = vrot.slane %v1547, 1
    %v2478 = vrot.slane %v1548, 1
    %v2479 = vsel %vm385, %v2477, %v2478
    %v2482 = vpack.c.bf16 %v2476, %v2138
    %v2483 = vpack.c.bf16 %v2479, %v2141
    %s2484 = scalar_lea.vmem [#allocation8], 112
    %v2485 = vld [vmem:[%s2484] sm:$0xf]
    %v2486 = vld [vmem:[%s2484 + $0x4] sm:$0xf]
    %v2487 = vld [vmem:[%s2484 + $0x8] sm:$0xf]
    %v2488 = vld [vmem:[%s2484 + $0xc] sm:$0xf]
    %v2493 = vunpack.c.l.b16 %v2485
    %v2494 = vunpack.c.l.b16 %v2486
    %v2495 = vunpack.c.l.b16 %v2487
    %v2496 = vunpack.c.l.b16 %v2488
    %v2497 = vpack.c.b16 %v2494, %v2493
    %v2498 = vpack.c.b16 %v2496, %v2495
    %v2502 = vsel %vm1450, %v2482, 0
    %v2505 = vsel %vm1450, %v2483, 0
    %2507 = vmatpush.bf16.msra.mxu0 0
    %2508 = vmatpush.bf16.msra.mxu0 0
    %2509 = vmatpush.bf16.msra.mxu0 0
    %2510 = vmatpush.bf16.msra.mxu0 0
    %2511 = vmatpush.bf16.msra.mxu0 0
    %2512 = vmatpush.bf16.msra.mxu0 0
    %2513 = vmatpush.bf16.msra.mxu0 %v2498
    %2514 = vmatpush.bf16.msra.mxu0 %v2497
    %2515 = vmatmul.bf16.gmra.mxu0 %v1686
    %v2516 = vpop.f32.mrf.mxu0
    %v2517 = vadd.f32 0.0, %v2516
    %v2518 = vpop.f32.mrf.mxu0
    %v2519 = vadd.f32 0.0, %v2518
    %2520 = vmatmul.bf16.gmra.mxu0 %v1689
    %v2521 = vpop.f32.mrf.mxu0
    %v2522 = vadd.f32 0.0, %v2521
    %v2523 = vpop.f32.mrf.mxu0
    %v2524 = vadd.f32 0.0, %v2523
    %2525 = vmatmul.bf16.gmra.mxu0 %v1692
    %v2526 = vpop.f32.mrf.mxu0
    %v2527 = vadd.f32 0.0, %v2526
    %v2528 = vpop.f32.mrf.mxu0
    %v2529 = vadd.f32 0.0, %v2528
    %2530 = vmatmul.bf16.gmra.mxu0 %v2502
    %v2531 = vpop.f32.mrf.mxu0
    %v2532 = vadd.f32 0.0, %v2531
    %v2533 = vpop.f32.mrf.mxu0
    %v2534 = vadd.f32 0.0, %v2533
    %2535 = vmatmul.bf16.gmra.mxu0 %v1698
    %v2536 = vpop.f32.mrf.mxu0
    %v2537 = vadd.f32 0.0, %v2536
    %v2538 = vpop.f32.mrf.mxu0
    %v2539 = vadd.f32 0.0, %v2538
    %2540 = vmatmul.bf16.gmra.mxu0 %v1701
    %v2541 = vpop.f32.mrf.mxu0
    %v2542 = vadd.f32 0.0, %v2541
    %v2543 = vpop.f32.mrf.mxu0
    %v2544 = vadd.f32 0.0, %v2543
    %2545 = vmatmul.bf16.gmra.mxu0 %v1704
    %v2546 = vpop.f32.mrf.mxu0
    %v2547 = vadd.f32 0.0, %v2546
    %v2548 = vpop.f32.mrf.mxu0
    %v2549 = vadd.f32 0.0, %v2548
    %2550 = vmatmul.bf16.gmra.mxu0 %v2505
    %v2551 = vpop.f32.mrf.mxu0
    %v2552 = vadd.f32 0.0, %v2551
    %v2553 = vpop.f32.mrf.mxu0
    %v2554 = vadd.f32 0.0, %v2553
    %2555 = vdwg.mxu0
    %v2556 = vadd.f32 %v2454, %v2517
    %v2557 = vadd.f32 %v2455, %v2519
    %v2558 = vadd.f32 %v2456, %v2522
    %v2559 = vadd.f32 %v2457, %v2524
    %v2560 = vadd.f32 %v2458, %v2527
    %v2561 = vadd.f32 %v2459, %v2529
    %v2562 = vadd.f32 %v2460, %v2532
    %v2563 = vadd.f32 %v2461, %v2534
    %v2564 = vadd.f32 %v2462, %v2537
    %v2565 = vadd.f32 %v2463, %v2539
    %v2566 = vadd.f32 %v2464, %v2542
    %v2567 = vadd.f32 %v2465, %v2544
    %v2568 = vadd.f32 %v2466, %v2547
    %v2569 = vadd.f32 %v2467, %v2549
    %v2570 = vadd.f32 %v2468, %v2552
    %v2571 = vadd.f32 %v2469, %v2554
    %v2572 = vrot.slane %v1527, 2
    %v2573 = vrot.slane %v1528, 2
    %v2574 = vsel %vm619, %v2572, %v2573
    %v2575 = vrot.slane %v1547, 2
    %v2576 = vrot.slane %v1548, 2
    %v2577 = vsel %vm619, %v2575, %v2576
    %v2580 = vpack.c.bf16 %v2574, %v2260
    %v2581 = vpack.c.bf16 %v2577, %v2263
    %s2582 = scalar_lea.vmem [#allocation8], 128
    %v2583 = vld [vmem:[%s2582] sm:$0xf]
    %v2584 = vld [vmem:[%s2582 + $0x4] sm:$0xf]
    %v2585 = vld [vmem:[%s2582 + $0x8] sm:$0xf]
    %v2586 = vld [vmem:[%s2582 + $0xc] sm:$0xf]
    %v2591 = vunpack.c.l.b16 %v2583
    %v2592 = vunpack.c.l.b16 %v2584
    %v2593 = vunpack.c.l.b16 %v2585
    %v2594 = vunpack.c.l.b16 %v2586
    %v2595 = vpack.c.b16 %v2592, %v2591
    %v2596 = vpack.c.b16 %v2594, %v2593
    %v2600 = vsel %vm1450, %v2580, 0
    %v2603 = vsel %vm1450, %v2581, 0
    %2605 = vmatpush.bf16.msra.mxu0 0
    %2606 = vmatpush.bf16.msra.mxu0 0
    %2607 = vmatpush.bf16.msra.mxu0 0
    %2608 = vmatpush.bf16.msra.mxu0 0
    %2609 = vmatpush.bf16.msra.mxu0 0
    %2610 = vmatpush.bf16.msra.mxu0 0
    %2611 = vmatpush.bf16.msra.mxu0 %v2596
    %2612 = vmatpush.bf16.msra.mxu0 %v2595
    %2613 = vmatmul.bf16.gmra.mxu0 %v1933
    %v2614 = vpop.f32.mrf.mxu0
    %v2615 = vadd.f32 0.0, %v2614
    %v2616 = vpop.f32.mrf.mxu0
    %v2617 = vadd.f32 0.0, %v2616
    %2618 = vmatmul.bf16.gmra.mxu0 %v1936
    %v2619 = vpop.f32.mrf.mxu0
    %v2620 = vadd.f32 0.0, %v2619
    %v2621 = vpop.f32.mrf.mxu0
    %v2622 = vadd.f32 0.0, %v2621
    %2623 = vmatmul.bf16.gmra.mxu0 %v1939
    %v2624 = vpop.f32.mrf.mxu0
    %v2625 = vadd.f32 0.0, %v2624
    %v2626 = vpop.f32.mrf.mxu0
    %v2627 = vadd.f32 0.0, %v2626
    %2628 = vmatmul.bf16.gmra.mxu0 %v2600
    %v2629 = vpop.f32.mrf.mxu0
    %v2630 = vadd.f32 0.0, %v2629
    %v2631 = vpop.f32.mrf.mxu0
    %v2632 = vadd.f32 0.0, %v2631
    %2633 = vmatmul.bf16.gmra.mxu0 %v1945
    %v2634 = vpop.f32.mrf.mxu0
    %v2635 = vadd.f32 0.0, %v2634
    %v2636 = vpop.f32.mrf.mxu0
    %v2637 = vadd.f32 0.0, %v2636
    %2638 = vmatmul.bf16.gmra.mxu0 %v1948
    %v2639 = vpop.f32.mrf.mxu0
    %v2640 = vadd.f32 0.0, %v2639
    %v2641 = vpop.f32.mrf.mxu0
    %v2642 = vadd.f32 0.0, %v2641
    %2643 = vmatmul.bf16.gmra.mxu0 %v1951
    %v2644 = vpop.f32.mrf.mxu0
    %v2645 = vadd.f32 0.0, %v2644
    %v2646 = vpop.f32.mrf.mxu0
    %v2647 = vadd.f32 0.0, %v2646
    %2648 = vmatmul.bf16.gmra.mxu0 %v2603
    %v2649 = vpop.f32.mrf.mxu0
    %v2650 = vadd.f32 0.0, %v2649
    %v2651 = vpop.f32.mrf.mxu0
    %v2652 = vadd.f32 0.0, %v2651
    %2653 = vdwg.mxu0
    %v2654 = vadd.f32 %v2556, %v2615
    %v2655 = vadd.f32 %v2557, %v2617
    %v2656 = vadd.f32 %v2558, %v2620
    %v2657 = vadd.f32 %v2559, %v2622
    %v2658 = vadd.f32 %v2560, %v2625
    %v2659 = vadd.f32 %v2561, %v2627
    %v2660 = vadd.f32 %v2562, %v2630
    %v2661 = vadd.f32 %v2563, %v2632
    %v2662 = vadd.f32 %v2564, %v2635
    %v2663 = vadd.f32 %v2565, %v2637
    %v2664 = vadd.f32 %v2566, %v2640
    %v2665 = vadd.f32 %v2567, %v2642
    %v2666 = vadd.f32 %v2568, %v2645
    %v2667 = vadd.f32 %v2569, %v2647
    %v2668 = vadd.f32 %v2570, %v2650
    %v2669 = vadd.f32 %v2571, %v2652
    %v2670 = vsel %vm1450, %v2654, 0.0
    %v2671 = vsel %vm1450, %v2655, 0.0
    %v2672 = vadd.f32 %v2670, %v2671
    %v2673 = vsel %vm1450, %v2656, 0.0
    %v2674 = vadd.f32 %v2672, %v2673
    %v2675 = vsel %vm1450, %v2657, 0.0
    %v2676 = vadd.f32 %v2674, %v2675
    %v2677 = vsel %vm1450, %v2658, 0.0
    %v2678 = vadd.f32 %v2676, %v2677
    %v2679 = vsel %vm1450, %v2659, 0.0
    %v2680 = vadd.f32 %v2678, %v2679
    %v2681 = vsel %vm1450, %v2660, 0.0
    %v2682 = vadd.f32 %v2680, %v2681
    %v2683 = vsel %vm1450, %v2661, 0.0
    %v2684 = vadd.f32 %v2682, %v2683
    %v2685 = vrot.slane %v2684, 4
    %v2686 = vadd.f32 %v2684, %v2685
    %v2687 = vrot.slane %v2686, 2
    %v2688 = vadd.f32 %v2686, %v2687
    %v2689 = vrot.slane %v2688, 1
    %v2690 = vadd.f32 %v2688, %v2689
    %v2691 = vsel %vm1450, %v2662, 0.0
    %v2692 = vsel %vm1450, %v2663, 0.0
    %v2693 = vadd.f32 %v2691, %v2692
    %v2694 = vsel %vm1450, %v2664, 0.0
    %v2695 = vadd.f32 %v2693, %v2694
    %v2696 = vsel %vm1450, %v2665, 0.0
    %v2697 = vadd.f32 %v2695, %v2696
    %v2698 = vsel %vm1450, %v2666, 0.0
    %v2699 = vadd.f32 %v2697, %v2698
    %v2700 = vsel %vm1450, %v2667, 0.0
    %v2701 = vadd.f32 %v2699, %v2700
    %v2702 = vsel %vm1450, %v2668, 0.0
    %v2703 = vadd.f32 %v2701, %v2702
    %v2704 = vsel %vm1450, %v2669, 0.0
    %v2705 = vadd.f32 %v2703, %v2704
    %v2706 = vrot.slane %v2705, 4
    %v2707 = vadd.f32 %v2705, %v2706
    %v2708 = vrot.slane %v2707, 2
    %v2709 = vadd.f32 %v2707, %v2708
    %v2710 = vrot.slane %v2709, 1
    %v2711 = vadd.f32 %v2709, %v2710
    %v2712 = vrcp.pop 64.0
    %v2713 = vmul.f32 64.0, %v2712
    %v2714 = vsub.f32 1.0, %v2713
    %v2715 = vmul.f32 %v2712, %v2714
    %v2716 = vadd.f32 %v2712, %v2715
    %vm2717 = vweird.f32 %v2712
    %v2718 = vsel %vm2717, %v2712, %v2716
    %v2719 = vmul.f32 %v2690, %v2718
    %v2720 = vmul.f32 %v2711, %v2718
    %v2721 = vld [vmem:[%s8] sm:$0xff]
    %v2722 = vld [vmem:[%s8 + $0x8] sm:$0xff]
    %v2723 = vld [vmem:[%s8 + $0x10] sm:$0xff]
    %v2724 = vld [vmem:[%s8 + $0x18] sm:$0xff]
    %vm2727 = vcmask 1041409
    %v2728 = vsel %vm2727, %v2720, %v2719
    %v2729 = vsel %vm1450, %v2728, 0
    %2731 = vmatpush.msra.mxu0 0.0
    %2732 = vmatpush.msra.mxu0 0.0
    %2733 = vmatpush.msra.mxu0 0.0
    %2734 = vmatpush.msra.mxu0 0.0
    %2735 = vmatpush.msra.mxu0 0.0
    %2736 = vmatpush.msra.mxu0 0.0
    %2737 = vmatpush.msra.mxu0 0.0
    %2738 = vmatpush.msra.mxu0 0.0
    %2739 = vmatpush.msra.mxu0 0.0
    %2740 = vmatpush.msra.mxu0 0.0
    %2741 = vmatpush.msra.mxu0 0.0
    %2742 = vmatpush.msra.mxu0 0.0
    %2743 = vmatpush.msra.mxu0 %v2724
    %2744 = vmatpush.msra.mxu0 %v2723
    %2745 = vmatpush.msra.mxu0 %v2722
    %2746 = vmatpush.msra.mxu0 %v2721
    %2747 = vmatmul.f32.gmra.mxu0 %v2729
    %v2748 = vpop.f32.mrf.mxu0
    %v2749 = vadd.f32 0.0, %v2748
    %2750 = vdwg.mxu0
    %v2751 = vmax.f32 %v2749, 0.0
    %v2752 = vld [vmem:[%s9] sm:$0x3]
    %vm2753 = vcmask 15360
    %v2755 = vsel %vm2753, %v2751, 0
    %vm2757 = vcmask 1041408
    %v2759 = vsel %vm2757, %v2752, 0
    %2761 = vmatpush.msra.mxu0 0.0
    %2762 = vmatpush.msra.mxu0 0.0
    %2763 = vmatpush.msra.mxu0 0.0
    %2764 = vmatpush.msra.mxu0 0.0
    %2765 = vmatpush.msra.mxu0 0.0
    %2766 = vmatpush.msra.mxu0 0.0
    %2767 = vmatpush.msra.mxu0 0.0
    %2768 = vmatpush.msra.mxu0 0.0
    %2769 = vmatpush.msra.mxu0 0.0
    %2770 = vmatpush.msra.mxu0 0.0
    %2771 = vmatpush.msra.mxu0 0.0
    %2772 = vmatpush.msra.mxu0 0.0
    %2773 = vmatpush.msra.mxu0 0.0
    %2774 = vmatpush.msra.mxu0 0.0
    %2775 = vmatpush.msra.mxu0 0.0
    %2776 = vmatpush.msra.mxu0 %v2759
    %2777 = vmatmul.f32.gmra.mxu0 %v2755
    %v2778 = vpop.f32.mrf.mxu0
    %v2779 = vadd.f32 0.0, %v2778
    %2780 = vdwg.mxu0
    %v2781 = vxor.u32 %v2779, 2147483648
    %v2782 = vmul.f32 %v2781, 1.442695
    %v2783 = vpow.pop %v2782
    %v2784 = vadd.f32 %v2783, 1.0
    %v2785 = vrcp.pop %v2784
    %v2786 = vmul.f32 %v2784, %v2785
    %v2787 = vsub.f32 1.0, %v2786
    %v2788 = vmul.f32 %v2785, %v2787
    %v2789 = vadd.f32 %v2785, %v2788
    %vm2790 = vweird.f32 %v2784
    %vm2791 = vweird.f32 %v2785
    %vm2792 = vmor %vm2790, %vm2791
    %v2793 = vsel %vm2792, %v2785, %v2789
    %v2794 = vand.u32 2147483647, %v2784
    %vm2795 = vcmp.eq.f32.partialorder %v2794, 8.507059e+37
    %v2796 = vand.u32 %v2784, 2147483648
    %v2797 = vor.u32 1.1754944e-38, %v2796
    %v2798 = vsel %vm2795, %v2797, %v2793
    %v2799 = vmul.f32 1.0, %v2798
    %v2801 = vrot.slane %v2799, 1
    %v2802 = vperm.slane %v2799, 0
    %v2803 = vperm.slane %v2801, 0
    %v2806 = vmul.f32 %v2654, %v2802
    %v2807 = vmul.f32 %v2655, %v2802
    %v2808 = vmul.f32 %v2656, %v2802
    %v2809 = vmul.f32 %v2657, %v2802
    %v2810 = vmul.f32 %v2658, %v2802
    %v2811 = vmul.f32 %v2659, %v2802
    %v2812 = vmul.f32 %v2660, %v2802
    %v2813 = vmul.f32 %v2661, %v2802
    %v2814 = vmul.f32 %v2662, %v2803
    %v2815 = vmul.f32 %v2663, %v2803
    %v2816 = vmul.f32 %v2664, %v2803
    %v2817 = vmul.f32 %v2665, %v2803
    %v2818 = vmul.f32 %v2666, %v2803
    %v2819 = vmul.f32 %v2667, %v2803
    %v2820 = vmul.f32 %v2668, %v2803
    %v2821 = vmul.f32 %v2669, %v2803
    %v2822 = vadd.f32 %v2806, %v264
    %v2823 = vadd.f32 %v2807, %v266
    %v2824 = vadd.f32 %v2808, %v269
    %v2825 = vadd.f32 %v2809, %v271
    %v2826 = vadd.f32 %v2810, %v274
    %v2827 = vadd.f32 %v2811, %v276
    %v2828 = vadd.f32 %v2812, %v279
    %v2829 = vadd.f32 %v2813, %v281
    %v2830 = vadd.f32 %v2814, %v284
    %v2831 = vadd.f32 %v2815, %v286
    %v2832 = vadd.f32 %v2816, %v289
    %v2833 = vadd.f32 %v2817, %v291
    %v2834 = vadd.f32 %v2818, %v294
    %v2835 = vadd.f32 %v2819, %v296
    %v2836 = vadd.f32 %v2820, %v299
    %v2837 = vadd.f32 %v2821, %v301
    %2838 = vst.msk [vmem:[%s10] sm:$0xff] %vm1450, %v2822
    %2839 = vst.msk [vmem:[%s10 + $0x8] sm:$0xff] %vm1450, %v2823
    %2840 = vst.msk [vmem:[%s10 + $0x10] sm:$0xff] %vm1450, %v2824
    %2841 = vst.msk [vmem:[%s10 + $0x18] sm:$0xff] %vm1450, %v2825
    %2842 = vst.msk [vmem:[%s10 + $0x20] sm:$0xff] %vm1450, %v2826
    %2843 = vst.msk [vmem:[%s10 + $0x28] sm:$0xff] %vm1450, %v2827
    %2844 = vst.msk [vmem:[%s10 + $0x30] sm:$0xff] %vm1450, %v2828
    %2845 = vst.msk [vmem:[%s10 + $0x38] sm:$0xff] %vm1450, %v2829
    %2846 = vst.msk [vmem:[%s10 + $0x40] sm:$0xff] %vm1450, %v2830
    %2847 = vst.msk [vmem:[%s10 + $0x48] sm:$0xff] %vm1450, %v2831
    %2848 = vst.msk [vmem:[%s10 + $0x50] sm:$0xff] %vm1450, %v2832
    %2849 = vst.msk [vmem:[%s10 + $0x58] sm:$0xff] %vm1450, %v2833
    %2850 = vst.msk [vmem:[%s10 + $0x60] sm:$0xff] %vm1450, %v2834
    %2851 = vst.msk [vmem:[%s10 + $0x68] sm:$0xff] %vm1450, %v2835
    %2852 = vst.msk [vmem:[%s10 + $0x70] sm:$0xff] %vm1450, %v2836
    %2853 = vst.msk [vmem:[%s10 + $0x78] sm:$0xff] %vm1450, %v2837
    // Predicated region
    $region54: #{tpu_custom_call.1} parent=1 // pred_check
      _
    $region55: #{tpu_custom_call.1} parent=1 // pred_check_branch
      %2855 = sbr.rel (0) target = $region57
    $region56: #{tpu_custom_call.1} parent=1 // pred_region
      _
    $region57: #{tpu_custom_call.1} parent=1 // pred_fallthru
      _
    // Predicated region
    $region58: #{tpu_custom_call.1} parent=1 // pred_check
      _
    $region59: #{tpu_custom_call.1} parent=1 // pred_check_branch
      %2857 = sbr.rel (0) target = $region61
    $region60: #{tpu_custom_call.1} parent=1 // pred_region
      _
    $region61: #{tpu_custom_call.1} parent=1 // pred_fallthru
      _
    %2858 = vsyncpa [#allocation5], 1
    %2859 = vsyncpa [#allocation7], 1

</llo_original>
